<compile_context>
chip_gen: v5e
topology: v5e:2x2
jax: 0.10.0
libtpu: 0.0.40
codegen_flags: <defaults>
</compile_context>

<pallas_src>
import functools

import jax
import jax.numpy as jnp
from jax.experimental import pallas as pl
from jax.experimental.pallas import tpu as pltpu

HIDDEN = 30          # real hidden size (PyTorch)
IN_FEAT = 4          # real input feature size
OUT_FEAT = 4         # real output feature size
HP = 32              # padded hidden size (lane-aligned)
PAD = 32             # padded input / feedback feature width (== HP so concat is aligned)
G4 = 4 * HP          # fused gate width (128 = one vreg row)


# ----------------------------------------------------------------------------
# Pallas kernel: the whole recurrence runs in one grid-less invocation.
# Inputs (all VMEM resident, total << 1 MiB):
#   x_ref  : (T, B, PAD)   time-major, features padded with zeros to PAD lanes
#   w1_ref : (PAD+HP, G4)  fused cell-1 weight  rows [x | h1], cols [i|f|o|g]
#   b1_ref : (1, G4)       fused cell-1 bias (b_ih + b_hh), padded lanes zero
#   w2_ref : (HP+HP, G4)   fused cell-2 weight  rows [h1 | h2]
#   b2_ref : (1, G4)
#   wl_ref : (HP, PAD)     linear weight, only [:HIDDEN, :OUT_FEAT] nonzero
#   bl_ref : (1, PAD)      linear bias,   only [:, :OUT_FEAT] nonzero
# Output:
#   out_ref: (T+future, B, OUT_FEAT)
# ----------------------------------------------------------------------------
def seq_kernel(x_ref, w1_ref, b1_ref, w2_ref, b2_ref, wl_ref, bl_ref, out_ref,
               *, t_in, future):
    B = x_ref.shape[1]

    # Hoist the (small) weights once; everything stays in VMEM/vregs.
    w1 = w1_ref[...]
    b1 = b1_ref[...]
    w2 = w2_ref[...]
    b2 = b2_ref[...]
    wl = wl_ref[...]
    bl = bl_ref[...]

    def lstm(x_in, h, c, w, b):
        # Single fused matmul per cell per step: (B, 2*32) @ (64, 128).
        z = jnp.concatenate([x_in, h], axis=-1)                       # (B, 64)
        gates = jnp.dot(z, w, preferred_element_type=jnp.float32) + b  # (B, 128)
        # Packed activations: gate layout is [i | f | o | g] (32 lanes each).
        s = jax.nn.sigmoid(gates[:, :3 * HP])                          # i, f, o
        g = jnp.tanh(gates[:, 3 * HP:])                                # g
        i = s[:, 0:HP]
        f = s[:, HP:2 * HP]
        o = s[:, 2 * HP:3 * HP]
        c_new = f * c + i * g
        h_new = o * jnp.tanh(c_new)
        return h_new, c_new

    def step(x_in, h1, c1, h2, c2):
        h1, c1 = lstm(x_in, h1, c1, w1, b1)
        h2, c2 = lstm(h1, h2, c2, w2, b2)
        # Linear output, kept PAD-wide (lanes OUT_FEAT: are zero) so it can be
        # fed straight back into cell 1 during the autoregressive phase.
        out = jnp.dot(h2, wl, preferred_element_type=jnp.float32) + bl  # (B, PAD)
        return out, h1, c1, h2, c2

    zeros_h = jnp.zeros((B, HP), jnp.float32)
    h1 = c1 = h2 = c2 = zeros_h
    out = jnp.zeros((B, PAD), jnp.float32)

    # Phase 1: consume the T input timesteps (fully unrolled, static indices).
    for t in range(t_in):
        x_t = x_ref[t]                                   # (B, PAD)
        out, h1, c1, h2, c2 = step(x_t, h1, c1, h2, c2)
        out_ref[t] = out[:, :OUT_FEAT]

    # Phase 2: `future` autoregressive steps, feeding the output back in.
    for j in range(future):
        out, h1, c1, h2, c2 = step(out, h1, c1, h2, c2)
        out_ref[t_in + j] = out[:, :OUT_FEAT]


# ----------------------------------------------------------------------------
# Wrapper
# ----------------------------------------------------------------------------
def sequence_forward(x, packed_params, future=0):
    """x: (B, T, 4) float32 -> (B, T+future, 4) float32."""
    w1, b1, w2, b2, wl, bl = packed_params
    B, T, F = x.shape

    # Time-major + zero-pad feature dim to PAD lanes (tiny one-time XLA ops).
    x_tm = jnp.transpose(x, (1, 0, 2))
    x_tm = jnp.pad(x_tm, ((0, 0), (0, 0), (0, PAD - F)))

    vmem = pl.BlockSpec(memory_space=pltpu.MemorySpace.VMEM)
    out_tm = pl.pallas_call(
        functools.partial(seq_kernel, t_in=T, future=future),
        out_shape=jax.ShapeDtypeStruct((T + future, B, OUT_FEAT), jnp.float32),
        in_specs=[vmem] * 7,
        out_specs=vmem,
    )(x_tm, w1, b1, w2, b2, wl, bl)

    return jnp.transpose(out_tm, (1, 0, 2))              # back to (B, T+future, 4)


# ----------------------------------------------------------------------------
# Parameter handling.
# init_params produces PyTorch-layout parameters; pack_params builds the fused,
# lane-padded kernel weights (gate order reordered from PyTorch's [i,f,g,o] to
# [i,f,o,g] so the sigmoid gates are contiguous).
# ----------------------------------------------------------------------------
def init_params(key):
    bound = 1.0 / (HIDDEN ** 0.5)
    ks = jax.random.split(key, 10)

    def u(k, shape):
        return jax.random.uniform(k, shape, jnp.float32, -bound, bound)

    w_ih1 = u(ks[0], (4 * HIDDEN, IN_FEAT))   # lstm1.weight_ih
    w_hh1 = u(ks[1], (4 * HIDDEN, HIDDEN))    # lstm1.weight_hh
    b_ih1 = u(ks[2], (4 * HIDDEN,))
    b_hh1 = u(ks[3], (4 * HIDDEN,))
    w_ih2 = u(ks[4], (4 * HIDDEN, HIDDEN))    # lstm2.weight_ih
    w_hh2 = u(ks[5], (4 * HIDDEN, HIDDEN))    # lstm2.weight_hh
    b_ih2 = u(ks[6], (4 * HIDDEN,))
    b_hh2 = u(ks[7], (4 * HIDDEN,))
    w_l = u(ks[8], (OUT_FEAT, HIDDEN))        # linear.weight
    b_l = u(ks[9], (OUT_FEAT,))               # linear.bias
    return (w_ih1, w_hh1, b_ih1, b_hh1, w_ih2, w_hh2, b_ih2, b_hh2, w_l, b_l)


def pack_params(params):
    (w_ih1, w_hh1, b_ih1, b_hh1,
     w_ih2, w_hh2, b_ih2, b_hh2, w_l, b_l) = params

    def reorder(w):
        # PyTorch gate order along dim 0 is [i, f, g, o]; reorder to [i, f, o, g].
        gi, gf, gg, go = jnp.split(w, 4, axis=0)
        return [gi, gf, go, gg]

    def pack_cell(w_ih, w_hh, b_ih, b_hh, in_dim):
        wih_g = reorder(w_ih)            # 4 x (HIDDEN, in_dim)
        whh_g = reorder(w_hh)            # 4 x (HIDDEN, HIDDEN)
        b_g = reorder(b_ih + b_hh)       # 4 x (HIDDEN,)
        w = jnp.zeros((PAD + HP, G4), jnp.float32)
        b = jnp.zeros((1, G4), jnp.float32)
        for k in range(4):
            col = k * HP
            w = w.at[:in_dim, col:col + HIDDEN].set(wih_g[k].T)
            w = w.at[PAD:PAD + HIDDEN, col:col + HIDDEN].set(whh_g[k].T)
            b = b.at[0, col:col + HIDDEN].set(b_g[k])
        return w, b

    w1, b1 = pack_cell(w_ih1, w_hh1, b_ih1, b_hh1, IN_FEAT)
    w2, b2 = pack_cell(w_ih2, w_hh2, b_ih2, b_hh2, HIDDEN)

    wl = jnp.zeros((HP, PAD), jnp.float32).at[:HIDDEN, :OUT_FEAT].set(w_l.T)
    bl = jnp.zeros((1, PAD), jnp.float32).at[0, :OUT_FEAT].set(b_l)
    return (w1, b1, w2, b2, wl, bl)


# ----------------------------------------------------------------------------
# Pure-JAX reference (mirrors the PyTorch forward) for correctness checking.
# ----------------------------------------------------------------------------
def sequence_ref(x, params, future=0):
    (w_ih1, w_hh1, b_ih1, b_hh1,
     w_ih2, w_hh2, b_ih2, b_hh2, w_l, b_l) = params
    B, T, _ = x.shape
    h1 = c1 = h2 = c2 = jnp.zeros((B, HIDDEN), jnp.float32)

    def cell(xin, h, c, w_ih, w_hh, b_ih, b_hh):
        gates = xin @ w_ih.T + b_ih + h @ w_hh.T + b_hh
        i, f, g, o = jnp.split(gates, 4, axis=-1)
        c_new = jax.nn.sigmoid(f) * c + jax.nn.sigmoid(i) * jnp.tanh(g)
        h_new = jax.nn.sigmoid(o) * jnp.tanh(c_new)
        return h_new, c_new

    outs = []
    out = jnp.zeros((B, OUT_FEAT), jnp.float32)
    for t in range(T):
        h1, c1 = cell(x[:, t, :], h1, c1, w_ih1, w_hh1, b_ih1, b_hh1)
        h2, c2 = cell(h1, h2, c2, w_ih2, w_hh2, b_ih2, b_hh2)
        out = h2 @ w_l.T + b_l
        outs.append(out)
    for _ in range(future):
        h1, c1 = cell(out, h1, c1, w_ih1, w_hh1, b_ih1, b_hh1)
        h2, c2 = cell(h1, h2, c2, w_ih2, w_hh2, b_ih2, b_hh2)
        out = h2 @ w_l.T + b_l
        outs.append(out)
    return jnp.stack(outs, axis=1)


if __name__ == "__main__":
    key = jax.random.PRNGKey(0)
    k_param, k_x = jax.random.split(key)

    B, T, FUTURE = 2, 8, 3
    params = init_params(k_param)
    packed = pack_params(params)
    x = jax.random.normal(k_x, (B, T, IN_FEAT), jnp.float32)

    out = jax.block_until_ready(sequence_forward(x, packed, future=FUTURE))

    ref = sequence_ref(x, params, future=FUTURE)
    assert out.shape == (B, T + FUTURE, OUT_FEAT), out.shape
    max_err = float(jnp.max(jnp.abs(out - ref)))
    assert max_err < 1e-4, max_err

    print("KERNEL_OK")
</pallas_src>

<mosaic_0001>
module attributes {stable_mosaic.version = 11 : i64} {
  func.func @seq_kernel(%arg0: memref<8x2x32xf32, #tpu.memory_space<vmem>>, %arg1: memref<64x128xf32, #tpu.memory_space<vmem>>, %arg2: memref<1x128xf32, #tpu.memory_space<vmem>>, %arg3: memref<64x128xf32, #tpu.memory_space<vmem>>, %arg4: memref<1x128xf32, #tpu.memory_space<vmem>>, %arg5: memref<32x32xf32, #tpu.memory_space<vmem>>, %arg6: memref<1x32xf32, #tpu.memory_space<vmem>>, %arg7: memref<11x2x4xf32, #tpu.memory_space<vmem>>) attributes {dimension_semantics = [], scalar_prefetch = 0 : i64, scratch_operands = 0 : i64, tpu.core_type = #tpu.core_type<tc>} {
    %c0 = arith.constant 0 : index
    %c0_0 = arith.constant 0 : index
    %0 = vector.load %arg1[%c0, %c0_0] : memref<64x128xf32, #tpu.memory_space<vmem>>, vector<64x128xf32>
    %c0_1 = arith.constant 0 : index
    %c0_2 = arith.constant 0 : index
    %1 = vector.load %arg2[%c0_1, %c0_2] : memref<1x128xf32, #tpu.memory_space<vmem>>, vector<1x128xf32>
    %c0_3 = arith.constant 0 : index
    %c0_4 = arith.constant 0 : index
    %2 = vector.load %arg3[%c0_3, %c0_4] : memref<64x128xf32, #tpu.memory_space<vmem>>, vector<64x128xf32>
    %c0_5 = arith.constant 0 : index
    %c0_6 = arith.constant 0 : index
    %3 = vector.load %arg4[%c0_5, %c0_6] : memref<1x128xf32, #tpu.memory_space<vmem>>, vector<1x128xf32>
    %c0_7 = arith.constant 0 : index
    %c0_8 = arith.constant 0 : index
    %4 = vector.load %arg5[%c0_7, %c0_8] : memref<32x32xf32, #tpu.memory_space<vmem>>, vector<32x32xf32>
    %c0_9 = arith.constant 0 : index
    %c0_10 = arith.constant 0 : index
    %5 = vector.load %arg6[%c0_9, %c0_10] : memref<1x32xf32, #tpu.memory_space<vmem>>, vector<1x32xf32>
    %cst = arith.constant 0.000000e+00 : f32
    %6 = vector.broadcast %cst : f32 to vector<2x32xf32>
    %c0_11 = arith.constant 0 : index
    %c0_12 = arith.constant 0 : index
    %c0_13 = arith.constant 0 : index
    %7 = vector.load %arg0[%c0_11, %c0_12, %c0_13] : memref<8x2x32xf32, #tpu.memory_space<vmem>>, vector<1x2x32xf32>
    %8 = vector.shape_cast %7 : vector<1x2x32xf32> to vector<2x32xf32>
    %9 = tpu.concatenate %8, %6 in 1 : vector<2x32xf32>, vector<2x32xf32> -> vector<2x64xf32>
    %cst_14 = arith.constant dense<0.000000e+00> : vector<2x128xf32>
    %10 = tpu.matmul %9, %0, %cst_14 {dimension_numbers = #tpu.dot_dimension_numbers<[1], [0], [0], [1], [0, 0, 1, 1], [], []>} : vector<2x64xf32>, vector<64x128xf32>, vector<2x128xf32> -> vector<2x128xf32>
    %11 = vector.broadcast %1 : vector<1x128xf32> to vector<2x128xf32>
    %12 = arith.addf %10, %11 : vector<2x128xf32>
    %13 = vector.extract_strided_slice %12 {offsets = [0, 0], sizes = [2, 96], strides = [1, 1]} : vector<2x128xf32> to vector<2x96xf32>
    %14 = arith.negf %13 : vector<2x96xf32>
    %15 = math.exp %14 : vector<2x96xf32>
    %cst_15 = arith.constant 1.000000e+00 : f32
    %16 = vector.broadcast %cst_15 : f32 to vector<2x96xf32>
    %17 = arith.addf %16, %15 : vector<2x96xf32>
    %18 = arith.divf %16, %17 : vector<2x96xf32>
    %19 = vector.extract_strided_slice %12 {offsets = [0, 96], sizes = [2, 32], strides = [1, 1]} : vector<2x128xf32> to vector<2x32xf32>
    %20 = math.tanh %19 : vector<2x32xf32>
    %21 = vector.extract_strided_slice %18 {offsets = [0, 0], sizes = [2, 32], strides = [1, 1]} : vector<2x96xf32> to vector<2x32xf32>
    %22 = vector.extract_strided_slice %18 {offsets = [0, 32], sizes = [2, 32], strides = [1, 1]} : vector<2x96xf32> to vector<2x32xf32>
    %23 = vector.extract_strided_slice %18 {offsets = [0, 64], sizes = [2, 32], strides = [1, 1]} : vector<2x96xf32> to vector<2x32xf32>
    %24 = arith.mulf %22, %6 : vector<2x32xf32>
    %25 = arith.mulf %21, %20 : vector<2x32xf32>
    %26 = arith.addf %24, %25 : vector<2x32xf32>
    %27 = math.tanh %26 : vector<2x32xf32>
    %28 = arith.mulf %23, %27 : vector<2x32xf32>
    %29 = tpu.concatenate %28, %6 in 1 : vector<2x32xf32>, vector<2x32xf32> -> vector<2x64xf32>
    %cst_16 = arith.constant dense<0.000000e+00> : vector<2x128xf32>
    %30 = tpu.matmul %29, %2, %cst_16 {dimension_numbers = #tpu.dot_dimension_numbers<[1], [0], [0], [1], [0, 0, 1, 1], [], []>} : vector<2x64xf32>, vector<64x128xf32>, vector<2x128xf32> -> vector<2x128xf32>
    %31 = vector.broadcast %3 : vector<1x128xf32> to vector<2x128xf32>
    %32 = arith.addf %30, %31 : vector<2x128xf32>
    %33 = vector.extract_strided_slice %32 {offsets = [0, 0], sizes = [2, 96], strides = [1, 1]} : vector<2x128xf32> to vector<2x96xf32>
    %34 = arith.negf %33 : vector<2x96xf32>
    %35 = math.exp %34 : vector<2x96xf32>
    %cst_17 = arith.constant 1.000000e+00 : f32
    %36 = vector.broadcast %cst_17 : f32 to vector<2x96xf32>
    %37 = arith.addf %36, %35 : vector<2x96xf32>
    %38 = arith.divf %36, %37 : vector<2x96xf32>
    %39 = vector.extract_strided_slice %32 {offsets = [0, 96], sizes = [2, 32], strides = [1, 1]} : vector<2x128xf32> to vector<2x32xf32>
    %40 = math.tanh %39 : vector<2x32xf32>
    %41 = vector.extract_strided_slice %38 {offsets = [0, 0], sizes = [2, 32], strides = [1, 1]} : vector<2x96xf32> to vector<2x32xf32>
    %42 = vector.extract_strided_slice %38 {offsets = [0, 32], sizes = [2, 32], strides = [1, 1]} : vector<2x96xf32> to vector<2x32xf32>
    %43 = vector.extract_strided_slice %38 {offsets = [0, 64], sizes = [2, 32], strides = [1, 1]} : vector<2x96xf32> to vector<2x32xf32>
    %44 = arith.mulf %42, %6 : vector<2x32xf32>
    %45 = arith.mulf %41, %40 : vector<2x32xf32>
    %46 = arith.addf %44, %45 : vector<2x32xf32>
    %47 = math.tanh %46 : vector<2x32xf32>
    %48 = arith.mulf %43, %47 : vector<2x32xf32>
    %cst_18 = arith.constant dense<0.000000e+00> : vector<2x32xf32>
    %49 = tpu.matmul %48, %4, %cst_18 {dimension_numbers = #tpu.dot_dimension_numbers<[1], [0], [0], [1], [0, 0, 1, 1], [], []>} : vector<2x32xf32>, vector<32x32xf32>, vector<2x32xf32> -> vector<2x32xf32>
    %50 = vector.broadcast %5 : vector<1x32xf32> to vector<2x32xf32>
    %51 = arith.addf %49, %50 : vector<2x32xf32>
    %52 = vector.extract_strided_slice %51 {offsets = [0, 0], sizes = [2, 4], strides = [1, 1]} : vector<2x32xf32> to vector<2x4xf32>
    %c0_19 = arith.constant 0 : index
    %c0_20 = arith.constant 0 : index
    %c0_21 = arith.constant 0 : index
    %53 = vector.load %arg7[%c0_19, %c0_20, %c0_21] : memref<11x2x4xf32, #tpu.memory_space<vmem>>, vector<1x2x4xf32>
    %54 = vector.shape_cast %53 : vector<1x2x4xf32> to vector<2x4xf32>
    %55 = vector.shape_cast %52 : vector<2x4xf32> to vector<1x2x4xf32>
    tpu.vector_store %arg7[%c0_19, %c0_20, %c0_21], %55 {strides = array<i32>} : memref<11x2x4xf32, #tpu.memory_space<vmem>>, vector<1x2x4xf32>,
    %c1 = arith.constant 1 : index
    %c0_22 = arith.constant 0 : index
    %c0_23 = arith.constant 0 : index
    %56 = vector.load %arg0[%c1, %c0_22, %c0_23] : memref<8x2x32xf32, #tpu.memory_space<vmem>>, vector<1x2x32xf32>
    %57 = vector.shape_cast %56 : vector<1x2x32xf32> to vector<2x32xf32>
    %58 = tpu.concatenate %57, %28 in 1 : vector<2x32xf32>, vector<2x32xf32> -> vector<2x64xf32>
    %cst_24 = arith.constant dense<0.000000e+00> : vector<2x128xf32>
    %59 = tpu.matmul %58, %0, %cst_24 {dimension_numbers = #tpu.dot_dimension_numbers<[1], [0], [0], [1], [0, 0, 1, 1], [], []>} : vector<2x64xf32>, vector<64x128xf32>, vector<2x128xf32> -> vector<2x128xf32>
    %60 = vector.broadcast %1 : vector<1x128xf32> to vector<2x128xf32>
    %61 = arith.addf %59, %60 : vector<2x128xf32>
    %62 = vector.extract_strided_slice %61 {offsets = [0, 0], sizes = [2, 96], strides = [1, 1]} : vector<2x128xf32> to vector<2x96xf32>
    %63 = arith.negf %62 : vector<2x96xf32>
    %64 = math.exp %63 : vector<2x96xf32>
    %cst_25 = arith.constant 1.000000e+00 : f32
    %65 = vector.broadcast %cst_25 : f32 to vector<2x96xf32>
    %66 = arith.addf %65, %64 : vector<2x96xf32>
    %67 = arith.divf %65, %66 : vector<2x96xf32>
    %68 = vector.extract_strided_slice %61 {offsets = [0, 96], sizes = [2, 32], strides = [1, 1]} : vector<2x128xf32> to vector<2x32xf32>
    %69 = math.tanh %68 : vector<2x32xf32>
    %70 = vector.extract_strided_slice %67 {offsets = [0, 0], sizes = [2, 32], strides = [1, 1]} : vector<2x96xf32> to vector<2x32xf32>
    %71 = vector.extract_strided_slice %67 {offsets = [0, 32], sizes = [2, 32], strides = [1, 1]} : vector<2x96xf32> to vector<2x32xf32>
    %72 = vector.extract_strided_slice %67 {offsets = [0, 64], sizes = [2, 32], strides = [1, 1]} : vector<2x96xf32> to vector<2x32xf32>
    %73 = arith.mulf %71, %26 : vector<2x32xf32>
    %74 = arith.mulf %70, %69 : vector<2x32xf32>
    %75 = arith.addf %73, %74 : vector<2x32xf32>
    %76 = math.tanh %75 : vector<2x32xf32>
    %77 = arith.mulf %72, %76 : vector<2x32xf32>
    %78 = tpu.concatenate %77, %48 in 1 : vector<2x32xf32>, vector<2x32xf32> -> vector<2x64xf32>
    %cst_26 = arith.constant dense<0.000000e+00> : vector<2x128xf32>
    %79 = tpu.matmul %78, %2, %cst_26 {dimension_numbers = #tpu.dot_dimension_numbers<[1], [0], [0], [1], [0, 0, 1, 1], [], []>} : vector<2x64xf32>, vector<64x128xf32>, vector<2x128xf32> -> vector<2x128xf32>
    %80 = vector.broadcast %3 : vector<1x128xf32> to vector<2x128xf32>
    %81 = arith.addf %79, %80 : vector<2x128xf32>
    %82 = vector.extract_strided_slice %81 {offsets = [0, 0], sizes = [2, 96], strides = [1, 1]} : vector<2x128xf32> to vector<2x96xf32>
    %83 = arith.negf %82 : vector<2x96xf32>
    %84 = math.exp %83 : vector<2x96xf32>
    %cst_27 = arith.constant 1.000000e+00 : f32
    %85 = vector.broadcast %cst_27 : f32 to vector<2x96xf32>
    %86 = arith.addf %85, %84 : vector<2x96xf32>
    %87 = arith.divf %85, %86 : vector<2x96xf32>
    %88 = vector.extract_strided_slice %81 {offsets = [0, 96], sizes = [2, 32], strides = [1, 1]} : vector<2x128xf32> to vector<2x32xf32>
    %89 = math.tanh %88 : vector<2x32xf32>
    %90 = vector.extract_strided_slice %87 {offsets = [0, 0], sizes = [2, 32], strides = [1, 1]} : vector<2x96xf32> to vector<2x32xf32>
    %91 = vector.extract_strided_slice %87 {offsets = [0, 32], sizes = [2, 32], strides = [1, 1]} : vector<2x96xf32> to vector<2x32xf32>
    %92 = vector.extract_strided_slice %87 {offsets = [0, 64], sizes = [2, 32], strides = [1, 1]} : vector<2x96xf32> to vector<2x32xf32>
    %93 = arith.mulf %91, %46 : vector<2x32xf32>
    %94 = arith.mulf %90, %89 : vector<2x32xf32>
    %95 = arith.addf %93, %94 : vector<2x32xf32>
    %96 = math.tanh %95 : vector<2x32xf32>
    %97 = arith.mulf %92, %96 : vector<2x32xf32>
    %cst_28 = arith.constant dense<0.000000e+00> : vector<2x32xf32>
    %98 = tpu.matmul %97, %4, %cst_28 {dimension_numbers = #tpu.dot_dimension_numbers<[1], [0], [0], [1], [0, 0, 1, 1], [], []>} : vector<2x32xf32>, vector<32x32xf32>, vector<2x32xf32> -> vector<2x32xf32>
    %99 = vector.broadcast %5 : vector<1x32xf32> to vector<2x32xf32>
    %100 = arith.addf %98, %99 : vector<2x32xf32>
    %101 = vector.extract_strided_slice %100 {offsets = [0, 0], sizes = [2, 4], strides = [1, 1]} : vector<2x32xf32> to vector<2x4xf32>
    %c1_29 = arith.constant 1 : index
    %c0_30 = arith.constant 0 : index
    %c0_31 = arith.constant 0 : index
    %102 = vector.load %arg7[%c1_29, %c0_30, %c0_31] : memref<11x2x4xf32, #tpu.memory_space<vmem>>, vector<1x2x4xf32>
    %103 = vector.shape_cast %102 : vector<1x2x4xf32> to vector<2x4xf32>
    %104 = vector.shape_cast %101 : vector<2x4xf32> to vector<1x2x4xf32>
    tpu.vector_store %arg7[%c1_29, %c0_30, %c0_31], %104 {strides = array<i32>} : memref<11x2x4xf32, #tpu.memory_space<vmem>>, vector<1x2x4xf32>,
    %c2 = arith.constant 2 : index
    %c0_32 = arith.constant 0 : index
    %c0_33 = arith.constant 0 : index
    %105 = vector.load %arg0[%c2, %c0_32, %c0_33] : memref<8x2x32xf32, #tpu.memory_space<vmem>>, vector<1x2x32xf32>
    %106 = vector.shape_cast %105 : vector<1x2x32xf32> to vector<2x32xf32>
    %107 = tpu.concatenate %106, %77 in 1 : vector<2x32xf32>, vector<2x32xf32> -> vector<2x64xf32>
    %cst_34 = arith.constant dense<0.000000e+00> : vector<2x128xf32>
    %108 = tpu.matmul %107, %0, %cst_34 {dimension_numbers = #tpu.dot_dimension_numbers<[1], [0], [0], [1], [0, 0, 1, 1], [], []>} : vector<2x64xf32>, vector<64x128xf32>, vector<2x128xf32> -> vector<2x128xf32>
    %109 = vector.broadcast %1 : vector<1x128xf32> to vector<2x128xf32>
    %110 = arith.addf %108, %109 : vector<2x128xf32>
    %111 = vector.extract_strided_slice %110 {offsets = [0, 0], sizes = [2, 96], strides = [1, 1]} : vector<2x128xf32> to vector<2x96xf32>
    %112 = arith.negf %111 : vector<2x96xf32>
    %113 = math.exp %112 : vector<2x96xf32>
    %cst_35 = arith.constant 1.000000e+00 : f32
    %114 = vector.broadcast %cst_35 : f32 to vector<2x96xf32>
    %115 = arith.addf %114, %113 : vector<2x96xf32>
    %116 = arith.divf %114, %115 : vector<2x96xf32>
    %117 = vector.extract_strided_slice %110 {offsets = [0, 96], sizes = [2, 32], strides = [1, 1]} : vector<2x128xf32> to vector<2x32xf32>
    %118 = math.tanh %117 : vector<2x32xf32>
    %119 = vector.extract_strided_slice %116 {offsets = [0, 0], sizes = [2, 32], strides = [1, 1]} : vector<2x96xf32> to vector<2x32xf32>
    %120 = vector.extract_strided_slice %116 {offsets = [0, 32], sizes = [2, 32], strides = [1, 1]} : vector<2x96xf32> to vector<2x32xf32>
    %121 = vector.extract_strided_slice %116 {offsets = [0, 64], sizes = [2, 32], strides = [1, 1]} : vector<2x96xf32> to vector<2x32xf32>
    %122 = arith.mulf %120, %75 : vector<2x32xf32>
    %123 = arith.mulf %119, %118 : vector<2x32xf32>
    %124 = arith.addf %122, %123 : vector<2x32xf32>
    %125 = math.tanh %124 : vector<2x32xf32>
    %126 = arith.mulf %121, %125 : vector<2x32xf32>
    %127 = tpu.concatenate %126, %97 in 1 : vector<2x32xf32>, vector<2x32xf32> -> vector<2x64xf32>
    %cst_36 = arith.constant dense<0.000000e+00> : vector<2x128xf32>
    %128 = tpu.matmul %127, %2, %cst_36 {dimension_numbers = #tpu.dot_dimension_numbers<[1], [0], [0], [1], [0, 0, 1, 1], [], []>} : vector<2x64xf32>, vector<64x128xf32>, vector<2x128xf32> -> vector<2x128xf32>
    %129 = vector.broadcast %3 : vector<1x128xf32> to vector<2x128xf32>
    %130 = arith.addf %128, %129 : vector<2x128xf32>
    %131 = vector.extract_strided_slice %130 {offsets = [0, 0], sizes = [2, 96], strides = [1, 1]} : vector<2x128xf32> to vector<2x96xf32>
    %132 = arith.negf %131 : vector<2x96xf32>
    %133 = math.exp %132 : vector<2x96xf32>
    %cst_37 = arith.constant 1.000000e+00 : f32
    %134 = vector.broadcast %cst_37 : f32 to vector<2x96xf32>
    %135 = arith.addf %134, %133 : vector<2x96xf32>
    %136 = arith.divf %134, %135 : vector<2x96xf32>
    %137 = vector.extract_strided_slice %130 {offsets = [0, 96], sizes = [2, 32], strides = [1, 1]} : vector<2x128xf32> to vector<2x32xf32>
    %138 = math.tanh %137 : vector<2x32xf32>
    %139 = vector.extract_strided_slice %136 {offsets = [0, 0], sizes = [2, 32], strides = [1, 1]} : vector<2x96xf32> to vector<2x32xf32>
    %140 = vector.extract_strided_slice %136 {offsets = [0, 32], sizes = [2, 32], strides = [1, 1]} : vector<2x96xf32> to vector<2x32xf32>
    %141 = vector.extract_strided_slice %136 {offsets = [0, 64], sizes = [2, 32], strides = [1, 1]} : vector<2x96xf32> to vector<2x32xf32>
    %142 = arith.mulf %140, %95 : vector<2x32xf32>
    %143 = arith.mulf %139, %138 : vector<2x32xf32>
    %144 = arith.addf %142, %143 : vector<2x32xf32>
    %145 = math.tanh %144 : vector<2x32xf32>
    %146 = arith.mulf %141, %145 : vector<2x32xf32>
    %cst_38 = arith.constant dense<0.000000e+00> : vector<2x32xf32>
    %147 = tpu.matmul %146, %4, %cst_38 {dimension_numbers = #tpu.dot_dimension_numbers<[1], [0], [0], [1], [0, 0, 1, 1], [], []>} : vector<2x32xf32>, vector<32x32xf32>, vector<2x32xf32> -> vector<2x32xf32>
    %148 = vector.broadcast %5 : vector<1x32xf32> to vector<2x32xf32>
    %149 = arith.addf %147, %148 : vector<2x32xf32>
    %150 = vector.extract_strided_slice %149 {offsets = [0, 0], sizes = [2, 4], strides = [1, 1]} : vector<2x32xf32> to vector<2x4xf32>
    %c2_39 = arith.constant 2 : index
    %c0_40 = arith.constant 0 : index
    %c0_41 = arith.constant 0 : index
    %151 = vector.load %arg7[%c2_39, %c0_40, %c0_41] : memref<11x2x4xf32, #tpu.memory_space<vmem>>, vector<1x2x4xf32>
    %152 = vector.shape_cast %151 : vector<1x2x4xf32> to vector<2x4xf32>
    %153 = vector.shape_cast %150 : vector<2x4xf32> to vector<1x2x4xf32>
    tpu.vector_store %arg7[%c2_39, %c0_40, %c0_41], %153 {strides = array<i32>} : memref<11x2x4xf32, #tpu.memory_space<vmem>>, vector<1x2x4xf32>,
    %c3 = arith.constant 3 : index
    %c0_42 = arith.constant 0 : index
    %c0_43 = arith.constant 0 : index
    %154 = vector.load %arg0[%c3, %c0_42, %c0_43] : memref<8x2x32xf32, #tpu.memory_space<vmem>>, vector<1x2x32xf32>
    %155 = vector.shape_cast %154 : vector<1x2x32xf32> to vector<2x32xf32>
    %156 = tpu.concatenate %155, %126 in 1 : vector<2x32xf32>, vector<2x32xf32> -> vector<2x64xf32>
    %cst_44 = arith.constant dense<0.000000e+00> : vector<2x128xf32>
    %157 = tpu.matmul %156, %0, %cst_44 {dimension_numbers = #tpu.dot_dimension_numbers<[1], [0], [0], [1], [0, 0, 1, 1], [], []>} : vector<2x64xf32>, vector<64x128xf32>, vector<2x128xf32> -> vector<2x128xf32>
    %158 = vector.broadcast %1 : vector<1x128xf32> to vector<2x128xf32>
    %159 = arith.addf %157, %158 : vector<2x128xf32>
    %160 = vector.extract_strided_slice %159 {offsets = [0, 0], sizes = [2, 96], strides = [1, 1]} : vector<2x128xf32> to vector<2x96xf32>
    %161 = arith.negf %160 : vector<2x96xf32>
    %162 = math.exp %161 : vector<2x96xf32>
    %cst_45 = arith.constant 1.000000e+00 : f32
    %163 = vector.broadcast %cst_45 : f32 to vector<2x96xf32>
    %164 = arith.addf %163, %162 : vector<2x96xf32>
    %165 = arith.divf %163, %164 : vector<2x96xf32>
    %166 = vector.extract_strided_slice %159 {offsets = [0, 96], sizes = [2, 32], strides = [1, 1]} : vector<2x128xf32> to vector<2x32xf32>
    %167 = math.tanh %166 : vector<2x32xf32>
    %168 = vector.extract_strided_slice %165 {offsets = [0, 0], sizes = [2, 32], strides = [1, 1]} : vector<2x96xf32> to vector<2x32xf32>
    %169 = vector.extract_strided_slice %165 {offsets = [0, 32], sizes = [2, 32], strides = [1, 1]} : vector<2x96xf32> to vector<2x32xf32>
    %170 = vector.extract_strided_slice %165 {offsets = [0, 64], sizes = [2, 32], strides = [1, 1]} : vector<2x96xf32> to vector<2x32xf32>
    %171 = arith.mulf %169, %124 : vector<2x32xf32>
    %172 = arith.mulf %168, %167 : vector<2x32xf32>
    %173 = arith.addf %171, %172 : vector<2x32xf32>
    %174 = math.tanh %173 : vector<2x32xf32>
    %175 = arith.mulf %170, %174 : vector<2x32xf32>
    %176 = tpu.concatenate %175, %146 in 1 : vector<2x32xf32>, vector<2x32xf32> -> vector<2x64xf32>
    %cst_46 = arith.constant dense<0.000000e+00> : vector<2x128xf32>
    %177 = tpu.matmul %176, %2, %cst_46 {dimension_numbers = #tpu.dot_dimension_numbers<[1], [0], [0], [1], [0, 0, 1, 1], [], []>} : vector<2x64xf32>, vector<64x128xf32>, vector<2x128xf32> -> vector<2x128xf32>
    %178 = vector.broadcast %3 : vector<1x128xf32> to vector<2x128xf32>
    %179 = arith.addf %177, %178 : vector<2x128xf32>
    %180 = vector.extract_strided_slice %179 {offsets = [0, 0], sizes = [2, 96], strides = [1, 1]} : vector<2x128xf32> to vector<2x96xf32>
    %181 = arith.negf %180 : vector<2x96xf32>
    %182 = math.exp %181 : vector<2x96xf32>
    %cst_47 = arith.constant 1.000000e+00 : f32
    %183 = vector.broadcast %cst_47 : f32 to vector<2x96xf32>
    %184 = arith.addf %183, %182 : vector<2x96xf32>
    %185 = arith.divf %183, %184 : vector<2x96xf32>
    %186 = vector.extract_strided_slice %179 {offsets = [0, 96], sizes = [2, 32], strides = [1, 1]} : vector<2x128xf32> to vector<2x32xf32>
    %187 = math.tanh %186 : vector<2x32xf32>
    %188 = vector.extract_strided_slice %185 {offsets = [0, 0], sizes = [2, 32], strides = [1, 1]} : vector<2x96xf32> to vector<2x32xf32>
    %189 = vector.extract_strided_slice %185 {offsets = [0, 32], sizes = [2, 32], strides = [1, 1]} : vector<2x96xf32> to vector<2x32xf32>
    %190 = vector.extract_strided_slice %185 {offsets = [0, 64], sizes = [2, 32], strides = [1, 1]} : vector<2x96xf32> to vector<2x32xf32>
    %191 = arith.mulf %189, %144 : vector<2x32xf32>
    %192 = arith.mulf %188, %187 : vector<2x32xf32>
    %193 = arith.addf %191, %192 : vector<2x32xf32>
    %194 = math.tanh %193 : vector<2x32xf32>
    %195 = arith.mulf %190, %194 : vector<2x32xf32>
    %cst_48 = arith.constant dense<0.000000e+00> : vector<2x32xf32>
    %196 = tpu.matmul %195, %4, %cst_48 {dimension_numbers = #tpu.dot_dimension_numbers<[1], [0], [0], [1], [0, 0, 1, 1], [], []>} : vector<2x32xf32>, vector<32x32xf32>, vector<2x32xf32> -> vector<2x32xf32>
    %197 = vector.broadcast %5 : vector<1x32xf32> to vector<2x32xf32>
    %198 = arith.addf %196, %197 : vector<2x32xf32>
    %199 = vector.extract_strided_slice %198 {offsets = [0, 0], sizes = [2, 4], strides = [1, 1]} : vector<2x32xf32> to vector<2x4xf32>
    %c3_49 = arith.constant 3 : index
    %c0_50 = arith.constant 0 : index
    %c0_51 = arith.constant 0 : index
    %200 = vector.load %arg7[%c3_49, %c0_50, %c0_51] : memref<11x2x4xf32, #tpu.memory_space<vmem>>, vector<1x2x4xf32>
    %201 = vector.shape_cast %200 : vector<1x2x4xf32> to vector<2x4xf32>
    %202 = vector.shape_cast %199 : vector<2x4xf32> to vector<1x2x4xf32>
    tpu.vector_store %arg7[%c3_49, %c0_50, %c0_51], %202 {strides = array<i32>} : memref<11x2x4xf32, #tpu.memory_space<vmem>>, vector<1x2x4xf32>,
    %c4 = arith.constant 4 : index
    %c0_52 = arith.constant 0 : index
    %c0_53 = arith.constant 0 : index
    %203 = vector.load %arg0[%c4, %c0_52, %c0_53] : memref<8x2x32xf32, #tpu.memory_space<vmem>>, vector<1x2x32xf32>
    %204 = vector.shape_cast %203 : vector<1x2x32xf32> to vector<2x32xf32>
    %205 = tpu.concatenate %204, %175 in 1 : vector<2x32xf32>, vector<2x32xf32> -> vector<2x64xf32>
    %cst_54 = arith.constant dense<0.000000e+00> : vector<2x128xf32>
    %206 = tpu.matmul %205, %0, %cst_54 {dimension_numbers = #tpu.dot_dimension_numbers<[1], [0], [0], [1], [0, 0, 1, 1], [], []>} : vector<2x64xf32>, vector<64x128xf32>, vector<2x128xf32> -> vector<2x128xf32>
    %207 = vector.broadcast %1 : vector<1x128xf32> to vector<2x128xf32>
    %208 = arith.addf %206, %207 : vector<2x128xf32>
    %209 = vector.extract_strided_slice %208 {offsets = [0, 0], sizes = [2, 96], strides = [1, 1]} : vector<2x128xf32> to vector<2x96xf32>
    %210 = arith.negf %209 : vector<2x96xf32>
    %211 = math.exp %210 : vector<2x96xf32>
    %cst_55 = arith.constant 1.000000e+00 : f32
    %212 = vector.broadcast %cst_55 : f32 to vector<2x96xf32>
    %213 = arith.addf %212, %211 : vector<2x96xf32>
    %214 = arith.divf %212, %213 : vector<2x96xf32>
    %215 = vector.extract_strided_slice %208 {offsets = [0, 96], sizes = [2, 32], strides = [1, 1]} : vector<2x128xf32> to vector<2x32xf32>
    %216 = math.tanh %215 : vector<2x32xf32>
    %217 = vector.extract_strided_slice %214 {offsets = [0, 0], sizes = [2, 32], strides = [1, 1]} : vector<2x96xf32> to vector<2x32xf32>
    %218 = vector.extract_strided_slice %214 {offsets = [0, 32], sizes = [2, 32], strides = [1, 1]} : vector<2x96xf32> to vector<2x32xf32>
    %219 = vector.extract_strided_slice %214 {offsets = [0, 64], sizes = [2, 32], strides = [1, 1]} : vector<2x96xf32> to vector<2x32xf32>
    %220 = arith.mulf %218, %173 : vector<2x32xf32>
    %221 = arith.mulf %217, %216 : vector<2x32xf32>
    %222 = arith.addf %220, %221 : vector<2x32xf32>
    %223 = math.tanh %222 : vector<2x32xf32>
    %224 = arith.mulf %219, %223 : vector<2x32xf32>
    %225 = tpu.concatenate %224, %195 in 1 : vector<2x32xf32>, vector<2x32xf32> -> vector<2x64xf32>
    %cst_56 = arith.constant dense<0.000000e+00> : vector<2x128xf32>
    %226 = tpu.matmul %225, %2, %cst_56 {dimension_numbers = #tpu.dot_dimension_numbers<[1], [0], [0], [1], [0, 0, 1, 1], [], []>} : vector<2x64xf32>, vector<64x128xf32>, vector<2x128xf32> -> vector<2x128xf32>
    %227 = vector.broadcast %3 : vector<1x128xf32> to vector<2x128xf32>
    %228 = arith.addf %226, %227 : vector<2x128xf32>
    %229 = vector.extract_strided_slice %228 {offsets = [0, 0], sizes = [2, 96], strides = [1, 1]} : vector<2x128xf32> to vector<2x96xf32>
    %230 = arith.negf %229 : vector<2x96xf32>
    %231 = math.exp %230 : vector<2x96xf32>
    %cst_57 = arith.constant 1.000000e+00 : f32
    %232 = vector.broadcast %cst_57 : f32 to vector<2x96xf32>
    %233 = arith.addf %232, %231 : vector<2x96xf32>
    %234 = arith.divf %232, %233 : vector<2x96xf32>
    %235 = vector.extract_strided_slice %228 {offsets = [0, 96], sizes = [2, 32], strides = [1, 1]} : vector<2x128xf32> to vector<2x32xf32>
    %236 = math.tanh %235 : vector<2x32xf32>
    %237 = vector.extract_strided_slice %234 {offsets = [0, 0], sizes = [2, 32], strides = [1, 1]} : vector<2x96xf32> to vector<2x32xf32>
    %238 = vector.extract_strided_slice %234 {offsets = [0, 32], sizes = [2, 32], strides = [1, 1]} : vector<2x96xf32> to vector<2x32xf32>
    %239 = vector.extract_strided_slice %234 {offsets = [0, 64], sizes = [2, 32], strides = [1, 1]} : vector<2x96xf32> to vector<2x32xf32>
    %240 = arith.mulf %238, %193 : vector<2x32xf32>
    %241 = arith.mulf %237, %236 : vector<2x32xf32>
    %242 = arith.addf %240, %241 : vector<2x32xf32>
    %243 = math.tanh %242 : vector<2x32xf32>
    %244 = arith.mulf %239, %243 : vector<2x32xf32>
    %cst_58 = arith.constant dense<0.000000e+00> : vector<2x32xf32>
    %245 = tpu.matmul %244, %4, %cst_58 {dimension_numbers = #tpu.dot_dimension_numbers<[1], [0], [0], [1], [0, 0, 1, 1], [], []>} : vector<2x32xf32>, vector<32x32xf32>, vector<2x32xf32> -> vector<2x32xf32>
    %246 = vector.broadcast %5 : vector<1x32xf32> to vector<2x32xf32>
    %247 = arith.addf %245, %246 : vector<2x32xf32>
    %248 = vector.extract_strided_slice %247 {offsets = [0, 0], sizes = [2, 4], strides = [1, 1]} : vector<2x32xf32> to vector<2x4xf32>
    %c4_59 = arith.constant 4 : index
    %c0_60 = arith.constant 0 : index
    %c0_61 = arith.constant 0 : index
    %249 = vector.load %arg7[%c4_59, %c0_60, %c0_61] : memref<11x2x4xf32, #tpu.memory_space<vmem>>, vector<1x2x4xf32>
    %250 = vector.shape_cast %249 : vector<1x2x4xf32> to vector<2x4xf32>
    %251 = vector.shape_cast %248 : vector<2x4xf32> to vector<1x2x4xf32>
    tpu.vector_store %arg7[%c4_59, %c0_60, %c0_61], %251 {strides = array<i32>} : memref<11x2x4xf32, #tpu.memory_space<vmem>>, vector<1x2x4xf32>,
    %c5 = arith.constant 5 : index
    %c0_62 = arith.constant 0 : index
    %c0_63 = arith.constant 0 : index
    %252 = vector.load %arg0[%c5, %c0_62, %c0_63] : memref<8x2x32xf32, #tpu.memory_space<vmem>>, vector<1x2x32xf32>
    %253 = vector.shape_cast %252 : vector<1x2x32xf32> to vector<2x32xf32>
    %254 = tpu.concatenate %253, %224 in 1 : vector<2x32xf32>, vector<2x32xf32> -> vector<2x64xf32>
    %cst_64 = arith.constant dense<0.000000e+00> : vector<2x128xf32>
    %255 = tpu.matmul %254, %0, %cst_64 {dimension_numbers = #tpu.dot_dimension_numbers<[1], [0], [0], [1], [0, 0, 1, 1], [], []>} : vector<2x64xf32>, vector<64x128xf32>, vector<2x128xf32> -> vector<2x128xf32>
    %256 = vector.broadcast %1 : vector<1x128xf32> to vector<2x128xf32>
    %257 = arith.addf %255, %256 : vector<2x128xf32>
    %258 = vector.extract_strided_slice %257 {offsets = [0, 0], sizes = [2, 96], strides = [1, 1]} : vector<2x128xf32> to vector<2x96xf32>
    %259 = arith.negf %258 : vector<2x96xf32>
    %260 = math.exp %259 : vector<2x96xf32>
    %cst_65 = arith.constant 1.000000e+00 : f32
    %261 = vector.broadcast %cst_65 : f32 to vector<2x96xf32>
    %262 = arith.addf %261, %260 : vector<2x96xf32>
    %263 = arith.divf %261, %262 : vector<2x96xf32>
    %264 = vector.extract_strided_slice %257 {offsets = [0, 96], sizes = [2, 32], strides = [1, 1]} : vector<2x128xf32> to vector<2x32xf32>
    %265 = math.tanh %264 : vector<2x32xf32>
    %266 = vector.extract_strided_slice %263 {offsets = [0, 0], sizes = [2, 32], strides = [1, 1]} : vector<2x96xf32> to vector<2x32xf32>
    %267 = vector.extract_strided_slice %263 {offsets = [0, 32], sizes = [2, 32], strides = [1, 1]} : vector<2x96xf32> to vector<2x32xf32>
    %268 = vector.extract_strided_slice %263 {offsets = [0, 64], sizes = [2, 32], strides = [1, 1]} : vector<2x96xf32> to vector<2x32xf32>
    %269 = arith.mulf %267, %222 : vector<2x32xf32>
    %270 = arith.mulf %266, %265 : vector<2x32xf32>
    %271 = arith.addf %269, %270 : vector<2x32xf32>
    %272 = math.tanh %271 : vector<2x32xf32>
    %273 = arith.mulf %268, %272 : vector<2x32xf32>
    %274 = tpu.concatenate %273, %244 in 1 : vector<2x32xf32>, vector<2x32xf32> -> vector<2x64xf32>
    %cst_66 = arith.constant dense<0.000000e+00> : vector<2x128xf32>
    %275 = tpu.matmul %274, %2, %cst_66 {dimension_numbers = #tpu.dot_dimension_numbers<[1], [0], [0], [1], [0, 0, 1, 1], [], []>} : vector<2x64xf32>, vector<64x128xf32>, vector<2x128xf32> -> vector<2x128xf32>
    %276 = vector.broadcast %3 : vector<1x128xf32> to vector<2x128xf32>
    %277 = arith.addf %275, %276 : vector<2x128xf32>
    %278 = vector.extract_strided_slice %277 {offsets = [0, 0], sizes = [2, 96], strides = [1, 1]} : vector<2x128xf32> to vector<2x96xf32>
    %279 = arith.negf %278 : vector<2x96xf32>
    %280 = math.exp %279 : vector<2x96xf32>
    %cst_67 = arith.constant 1.000000e+00 : f32
    %281 = vector.broadcast %cst_67 : f32 to vector<2x96xf32>
    %282 = arith.addf %281, %280 : vector<2x96xf32>
    %283 = arith.divf %281, %282 : vector<2x96xf32>
    %284 = vector.extract_strided_slice %277 {offsets = [0, 96], sizes = [2, 32], strides = [1, 1]} : vector<2x128xf32> to vector<2x32xf32>
    %285 = math.tanh %284 : vector<2x32xf32>
    %286 = vector.extract_strided_slice %283 {offsets = [0, 0], sizes = [2, 32], strides = [1, 1]} : vector<2x96xf32> to vector<2x32xf32>
    %287 = vector.extract_strided_slice %283 {offsets = [0, 32], sizes = [2, 32], strides = [1, 1]} : vector<2x96xf32> to vector<2x32xf32>
    %288 = vector.extract_strided_slice %283 {offsets = [0, 64], sizes = [2, 32], strides = [1, 1]} : vector<2x96xf32> to vector<2x32xf32>
    %289 = arith.mulf %287, %242 : vector<2x32xf32>
    %290 = arith.mulf %286, %285 : vector<2x32xf32>
    %291 = arith.addf %289, %290 : vector<2x32xf32>
    %292 = math.tanh %291 : vector<2x32xf32>
    %293 = arith.mulf %288, %292 : vector<2x32xf32>
    %cst_68 = arith.constant dense<0.000000e+00> : vector<2x32xf32>
    %294 = tpu.matmul %293, %4, %cst_68 {dimension_numbers = #tpu.dot_dimension_numbers<[1], [0], [0], [1], [0, 0, 1, 1], [], []>} : vector<2x32xf32>, vector<32x32xf32>, vector<2x32xf32> -> vector<2x32xf32>
    %295 = vector.broadcast %5 : vector<1x32xf32> to vector<2x32xf32>
    %296 = arith.addf %294, %295 : vector<2x32xf32>
    %297 = vector.extract_strided_slice %296 {offsets = [0, 0], sizes = [2, 4], strides = [1, 1]} : vector<2x32xf32> to vector<2x4xf32>
    %c5_69 = arith.constant 5 : index
    %c0_70 = arith.constant 0 : index
    %c0_71 = arith.constant 0 : index
    %298 = vector.load %arg7[%c5_69, %c0_70, %c0_71] : memref<11x2x4xf32, #tpu.memory_space<vmem>>, vector<1x2x4xf32>
    %299 = vector.shape_cast %298 : vector<1x2x4xf32> to vector<2x4xf32>
    %300 = vector.shape_cast %297 : vector<2x4xf32> to vector<1x2x4xf32>
    tpu.vector_store %arg7[%c5_69, %c0_70, %c0_71], %300 {strides = array<i32>} : memref<11x2x4xf32, #tpu.memory_space<vmem>>, vector<1x2x4xf32>,
    %c6 = arith.constant 6 : index
    %c0_72 = arith.constant 0 : index
    %c0_73 = arith.constant 0 : index
    %301 = vector.load %arg0[%c6, %c0_72, %c0_73] : memref<8x2x32xf32, #tpu.memory_space<vmem>>, vector<1x2x32xf32>
    %302 = vector.shape_cast %301 : vector<1x2x32xf32> to vector<2x32xf32>
    %303 = tpu.concatenate %302, %273 in 1 : vector<2x32xf32>, vector<2x32xf32> -> vector<2x64xf32>
    %cst_74 = arith.constant dense<0.000000e+00> : vector<2x128xf32>
    %304 = tpu.matmul %303, %0, %cst_74 {dimension_numbers = #tpu.dot_dimension_numbers<[1], [0], [0], [1], [0, 0, 1, 1], [], []>} : vector<2x64xf32>, vector<64x128xf32>, vector<2x128xf32> -> vector<2x128xf32>
    %305 = vector.broadcast %1 : vector<1x128xf32> to vector<2x128xf32>
    %306 = arith.addf %304, %305 : vector<2x128xf32>
    %307 = vector.extract_strided_slice %306 {offsets = [0, 0], sizes = [2, 96], strides = [1, 1]} : vector<2x128xf32> to vector<2x96xf32>
    %308 = arith.negf %307 : vector<2x96xf32>
    %309 = math.exp %308 : vector<2x96xf32>
    %cst_75 = arith.constant 1.000000e+00 : f32
    %310 = vector.broadcast %cst_75 : f32 to vector<2x96xf32>
    %311 = arith.addf %310, %309 : vector<2x96xf32>
    %312 = arith.divf %310, %311 : vector<2x96xf32>
    %313 = vector.extract_strided_slice %306 {offsets = [0, 96], sizes = [2, 32], strides = [1, 1]} : vector<2x128xf32> to vector<2x32xf32>
    %314 = math.tanh %313 : vector<2x32xf32>
    %315 = vector.extract_strided_slice %312 {offsets = [0, 0], sizes = [2, 32], strides = [1, 1]} : vector<2x96xf32> to vector<2x32xf32>
    %316 = vector.extract_strided_slice %312 {offsets = [0, 32], sizes = [2, 32], strides = [1, 1]} : vector<2x96xf32> to vector<2x32xf32>
    %317 = vector.extract_strided_slice %312 {offsets = [0, 64], sizes = [2, 32], strides = [1, 1]} : vector<2x96xf32> to vector<2x32xf32>
    %318 = arith.mulf %316, %271 : vector<2x32xf32>
    %319 = arith.mulf %315, %314 : vector<2x32xf32>
    %320 = arith.addf %318, %319 : vector<2x32xf32>
    %321 = math.tanh %320 : vector<2x32xf32>
    %322 = arith.mulf %317, %321 : vector<2x32xf32>
    %323 = tpu.concatenate %322, %293 in 1 : vector<2x32xf32>, vector<2x32xf32> -> vector<2x64xf32>
    %cst_76 = arith.constant dense<0.000000e+00> : vector<2x128xf32>
    %324 = tpu.matmul %323, %2, %cst_76 {dimension_numbers = #tpu.dot_dimension_numbers<[1], [0], [0], [1], [0, 0, 1, 1], [], []>} : vector<2x64xf32>, vector<64x128xf32>, vector<2x128xf32> -> vector<2x128xf32>
    %325 = vector.broadcast %3 : vector<1x128xf32> to vector<2x128xf32>
    %326 = arith.addf %324, %325 : vector<2x128xf32>
    %327 = vector.extract_strided_slice %326 {offsets = [0, 0], sizes = [2, 96], strides = [1, 1]} : vector<2x128xf32> to vector<2x96xf32>
    %328 = arith.negf %327 : vector<2x96xf32>
    %329 = math.exp %328 : vector<2x96xf32>
    %cst_77 = arith.constant 1.000000e+00 : f32
    %330 = vector.broadcast %cst_77 : f32 to vector<2x96xf32>
    %331 = arith.addf %330, %329 : vector<2x96xf32>
    %332 = arith.divf %330, %331 : vector<2x96xf32>
    %333 = vector.extract_strided_slice %326 {offsets = [0, 96], sizes = [2, 32], strides = [1, 1]} : vector<2x128xf32> to vector<2x32xf32>
    %334 = math.tanh %333 : vector<2x32xf32>
    %335 = vector.extract_strided_slice %332 {offsets = [0, 0], sizes = [2, 32], strides = [1, 1]} : vector<2x96xf32> to vector<2x32xf32>
    %336 = vector.extract_strided_slice %332 {offsets = [0, 32], sizes = [2, 32], strides = [1, 1]} : vector<2x96xf32> to vector<2x32xf32>
    %337 = vector.extract_strided_slice %332 {offsets = [0, 64], sizes = [2, 32], strides = [1, 1]} : vector<2x96xf32> to vector<2x32xf32>
    %338 = arith.mulf %336, %291 : vector<2x32xf32>
    %339 = arith.mulf %335, %334 : vector<2x32xf32>
    %340 = arith.addf %338, %339 : vector<2x32xf32>
    %341 = math.tanh %340 : vector<2x32xf32>
    %342 = arith.mulf %337, %341 : vector<2x32xf32>
    %cst_78 = arith.constant dense<0.000000e+00> : vector<2x32xf32>
    %343 = tpu.matmul %342, %4, %cst_78 {dimension_numbers = #tpu.dot_dimension_numbers<[1], [0], [0], [1], [0, 0, 1, 1], [], []>} : vector<2x32xf32>, vector<32x32xf32>, vector<2x32xf32> -> vector<2x32xf32>
    %344 = vector.broadcast %5 : vector<1x32xf32> to vector<2x32xf32>
    %345 = arith.addf %343, %344 : vector<2x32xf32>
    %346 = vector.extract_strided_slice %345 {offsets = [0, 0], sizes = [2, 4], strides = [1, 1]} : vector<2x32xf32> to vector<2x4xf32>
    %c6_79 = arith.constant 6 : index
    %c0_80 = arith.constant 0 : index
    %c0_81 = arith.constant 0 : index
    %347 = vector.load %arg7[%c6_79, %c0_80, %c0_81] : memref<11x2x4xf32, #tpu.memory_space<vmem>>, vector<1x2x4xf32>
    %348 = vector.shape_cast %347 : vector<1x2x4xf32> to vector<2x4xf32>
    %349 = vector.shape_cast %346 : vector<2x4xf32> to vector<1x2x4xf32>
    tpu.vector_store %arg7[%c6_79, %c0_80, %c0_81], %349 {strides = array<i32>} : memref<11x2x4xf32, #tpu.memory_space<vmem>>, vector<1x2x4xf32>,
    %c7 = arith.constant 7 : index
    %c0_82 = arith.constant 0 : index
    %c0_83 = arith.constant 0 : index
    %350 = vector.load %arg0[%c7, %c0_82, %c0_83] : memref<8x2x32xf32, #tpu.memory_space<vmem>>, vector<1x2x32xf32>
    %351 = vector.shape_cast %350 : vector<1x2x32xf32> to vector<2x32xf32>
    %352 = tpu.concatenate %351, %322 in 1 : vector<2x32xf32>, vector<2x32xf32> -> vector<2x64xf32>
    %cst_84 = arith.constant dense<0.000000e+00> : vector<2x128xf32>
    %353 = tpu.matmul %352, %0, %cst_84 {dimension_numbers = #tpu.dot_dimension_numbers<[1], [0], [0], [1], [0, 0, 1, 1], [], []>} : vector<2x64xf32>, vector<64x128xf32>, vector<2x128xf32> -> vector<2x128xf32>
    %354 = vector.broadcast %1 : vector<1x128xf32> to vector<2x128xf32>
    %355 = arith.addf %353, %354 : vector<2x128xf32>
    %356 = vector.extract_strided_slice %355 {offsets = [0, 0], sizes = [2, 96], strides = [1, 1]} : vector<2x128xf32> to vector<2x96xf32>
    %357 = arith.negf %356 : vector<2x96xf32>
    %358 = math.exp %357 : vector<2x96xf32>
    %cst_85 = arith.constant 1.000000e+00 : f32
    %359 = vector.broadcast %cst_85 : f32 to vector<2x96xf32>
    %360 = arith.addf %359, %358 : vector<2x96xf32>
    %361 = arith.divf %359, %360 : vector<2x96xf32>
    %362 = vector.extract_strided_slice %355 {offsets = [0, 96], sizes = [2, 32], strides = [1, 1]} : vector<2x128xf32> to vector<2x32xf32>
    %363 = math.tanh %362 : vector<2x32xf32>
    %364 = vector.extract_strided_slice %361 {offsets = [0, 0], sizes = [2, 32], strides = [1, 1]} : vector<2x96xf32> to vector<2x32xf32>
    %365 = vector.extract_strided_slice %361 {offsets = [0, 32], sizes = [2, 32], strides = [1, 1]} : vector<2x96xf32> to vector<2x32xf32>
    %366 = vector.extract_strided_slice %361 {offsets = [0, 64], sizes = [2, 32], strides = [1, 1]} : vector<2x96xf32> to vector<2x32xf32>
    %367 = arith.mulf %365, %320 : vector<2x32xf32>
    %368 = arith.mulf %364, %363 : vector<2x32xf32>
    %369 = arith.addf %367, %368 : vector<2x32xf32>
    %370 = math.tanh %369 : vector<2x32xf32>
    %371 = arith.mulf %366, %370 : vector<2x32xf32>
    %372 = tpu.concatenate %371, %342 in 1 : vector<2x32xf32>, vector<2x32xf32> -> vector<2x64xf32>
    %cst_86 = arith.constant dense<0.000000e+00> : vector<2x128xf32>
    %373 = tpu.matmul %372, %2, %cst_86 {dimension_numbers = #tpu.dot_dimension_numbers<[1], [0], [0], [1], [0, 0, 1, 1], [], []>} : vector<2x64xf32>, vector<64x128xf32>, vector<2x128xf32> -> vector<2x128xf32>
    %374 = vector.broadcast %3 : vector<1x128xf32> to vector<2x128xf32>
    %375 = arith.addf %373, %374 : vector<2x128xf32>
    %376 = vector.extract_strided_slice %375 {offsets = [0, 0], sizes = [2, 96], strides = [1, 1]} : vector<2x128xf32> to vector<2x96xf32>
    %377 = arith.negf %376 : vector<2x96xf32>
    %378 = math.exp %377 : vector<2x96xf32>
    %cst_87 = arith.constant 1.000000e+00 : f32
    %379 = vector.broadcast %cst_87 : f32 to vector<2x96xf32>
    %380 = arith.addf %379, %378 : vector<2x96xf32>
    %381 = arith.divf %379, %380 : vector<2x96xf32>
    %382 = vector.extract_strided_slice %375 {offsets = [0, 96], sizes = [2, 32], strides = [1, 1]} : vector<2x128xf32> to vector<2x32xf32>
    %383 = math.tanh %382 : vector<2x32xf32>
    %384 = vector.extract_strided_slice %381 {offsets = [0, 0], sizes = [2, 32], strides = [1, 1]} : vector<2x96xf32> to vector<2x32xf32>
    %385 = vector.extract_strided_slice %381 {offsets = [0, 32], sizes = [2, 32], strides = [1, 1]} : vector<2x96xf32> to vector<2x32xf32>
    %386 = vector.extract_strided_slice %381 {offsets = [0, 64], sizes = [2, 32], strides = [1, 1]} : vector<2x96xf32> to vector<2x32xf32>
    %387 = arith.mulf %385, %340 : vector<2x32xf32>
    %388 = arith.mulf %384, %383 : vector<2x32xf32>
    %389 = arith.addf %387, %388 : vector<2x32xf32>
    %390 = math.tanh %389 : vector<2x32xf32>
    %391 = arith.mulf %386, %390 : vector<2x32xf32>
    %cst_88 = arith.constant dense<0.000000e+00> : vector<2x32xf32>
    %392 = tpu.matmul %391, %4, %cst_88 {dimension_numbers = #tpu.dot_dimension_numbers<[1], [0], [0], [1], [0, 0, 1, 1], [], []>} : vector<2x32xf32>, vector<32x32xf32>, vector<2x32xf32> -> vector<2x32xf32>
    %393 = vector.broadcast %5 : vector<1x32xf32> to vector<2x32xf32>
    %394 = arith.addf %392, %393 : vector<2x32xf32>
    %395 = vector.extract_strided_slice %394 {offsets = [0, 0], sizes = [2, 4], strides = [1, 1]} : vector<2x32xf32> to vector<2x4xf32>
    %c7_89 = arith.constant 7 : index
    %c0_90 = arith.constant 0 : index
    %c0_91 = arith.constant 0 : index
    %396 = vector.load %arg7[%c7_89, %c0_90, %c0_91] : memref<11x2x4xf32, #tpu.memory_space<vmem>>, vector<1x2x4xf32>
    %397 = vector.shape_cast %396 : vector<1x2x4xf32> to vector<2x4xf32>
    %398 = vector.shape_cast %395 : vector<2x4xf32> to vector<1x2x4xf32>
    tpu.vector_store %arg7[%c7_89, %c0_90, %c0_91], %398 {strides = array<i32>} : memref<11x2x4xf32, #tpu.memory_space<vmem>>, vector<1x2x4xf32>,
    %399 = tpu.concatenate %394, %371 in 1 : vector<2x32xf32>, vector<2x32xf32> -> vector<2x64xf32>
    %cst_92 = arith.constant dense<0.000000e+00> : vector<2x128xf32>
    %400 = tpu.matmul %399, %0, %cst_92 {dimension_numbers = #tpu.dot_dimension_numbers<[1], [0], [0], [1], [0, 0, 1, 1], [], []>} : vector<2x64xf32>, vector<64x128xf32>, vector<2x128xf32> -> vector<2x128xf32>
    %401 = vector.broadcast %1 : vector<1x128xf32> to vector<2x128xf32>
    %402 = arith.addf %400, %401 : vector<2x128xf32>
    %403 = vector.extract_strided_slice %402 {offsets = [0, 0], sizes = [2, 96], strides = [1, 1]} : vector<2x128xf32> to vector<2x96xf32>
    %404 = arith.negf %403 : vector<2x96xf32>
    %405 = math.exp %404 : vector<2x96xf32>
    %cst_93 = arith.constant 1.000000e+00 : f32
    %406 = vector.broadcast %cst_93 : f32 to vector<2x96xf32>
    %407 = arith.addf %406, %405 : vector<2x96xf32>
    %408 = arith.divf %406, %407 : vector<2x96xf32>
    %409 = vector.extract_strided_slice %402 {offsets = [0, 96], sizes = [2, 32], strides = [1, 1]} : vector<2x128xf32> to vector<2x32xf32>
    %410 = math.tanh %409 : vector<2x32xf32>
    %411 = vector.extract_strided_slice %408 {offsets = [0, 0], sizes = [2, 32], strides = [1, 1]} : vector<2x96xf32> to vector<2x32xf32>
    %412 = vector.extract_strided_slice %408 {offsets = [0, 32], sizes = [2, 32], strides = [1, 1]} : vector<2x96xf32> to vector<2x32xf32>
    %413 = vector.extract_strided_slice %408 {offsets = [0, 64], sizes = [2, 32], strides = [1, 1]} : vector<2x96xf32> to vector<2x32xf32>
    %414 = arith.mulf %412, %369 : vector<2x32xf32>
    %415 = arith.mulf %411, %410 : vector<2x32xf32>
    %416 = arith.addf %414, %415 : vector<2x32xf32>
    %417 = math.tanh %416 : vector<2x32xf32>
    %418 = arith.mulf %413, %417 : vector<2x32xf32>
    %419 = tpu.concatenate %418, %391 in 1 : vector<2x32xf32>, vector<2x32xf32> -> vector<2x64xf32>
    %cst_94 = arith.constant dense<0.000000e+00> : vector<2x128xf32>
    %420 = tpu.matmul %419, %2, %cst_94 {dimension_numbers = #tpu.dot_dimension_numbers<[1], [0], [0], [1], [0, 0, 1, 1], [], []>} : vector<2x64xf32>, vector<64x128xf32>, vector<2x128xf32> -> vector<2x128xf32>
    %421 = vector.broadcast %3 : vector<1x128xf32> to vector<2x128xf32>
    %422 = arith.addf %420, %421 : vector<2x128xf32>
    %423 = vector.extract_strided_slice %422 {offsets = [0, 0], sizes = [2, 96], strides = [1, 1]} : vector<2x128xf32> to vector<2x96xf32>
    %424 = arith.negf %423 : vector<2x96xf32>
    %425 = math.exp %424 : vector<2x96xf32>
    %cst_95 = arith.constant 1.000000e+00 : f32
    %426 = vector.broadcast %cst_95 : f32 to vector<2x96xf32>
    %427 = arith.addf %426, %425 : vector<2x96xf32>
    %428 = arith.divf %426, %427 : vector<2x96xf32>
    %429 = vector.extract_strided_slice %422 {offsets = [0, 96], sizes = [2, 32], strides = [1, 1]} : vector<2x128xf32> to vector<2x32xf32>
    %430 = math.tanh %429 : vector<2x32xf32>
    %431 = vector.extract_strided_slice %428 {offsets = [0, 0], sizes = [2, 32], strides = [1, 1]} : vector<2x96xf32> to vector<2x32xf32>
    %432 = vector.extract_strided_slice %428 {offsets = [0, 32], sizes = [2, 32], strides = [1, 1]} : vector<2x96xf32> to vector<2x32xf32>
    %433 = vector.extract_strided_slice %428 {offsets = [0, 64], sizes = [2, 32], strides = [1, 1]} : vector<2x96xf32> to vector<2x32xf32>
    %434 = arith.mulf %432, %389 : vector<2x32xf32>
    %435 = arith.mulf %431, %430 : vector<2x32xf32>
    %436 = arith.addf %434, %435 : vector<2x32xf32>
    %437 = math.tanh %436 : vector<2x32xf32>
    %438 = arith.mulf %433, %437 : vector<2x32xf32>
    %cst_96 = arith.constant dense<0.000000e+00> : vector<2x32xf32>
    %439 = tpu.matmul %438, %4, %cst_96 {dimension_numbers = #tpu.dot_dimension_numbers<[1], [0], [0], [1], [0, 0, 1, 1], [], []>} : vector<2x32xf32>, vector<32x32xf32>, vector<2x32xf32> -> vector<2x32xf32>
    %440 = vector.broadcast %5 : vector<1x32xf32> to vector<2x32xf32>
    %441 = arith.addf %439, %440 : vector<2x32xf32>
    %442 = vector.extract_strided_slice %441 {offsets = [0, 0], sizes = [2, 4], strides = [1, 1]} : vector<2x32xf32> to vector<2x4xf32>
    %c8 = arith.constant 8 : index
    %c0_97 = arith.constant 0 : index
    %c0_98 = arith.constant 0 : index
    %443 = vector.load %arg7[%c8, %c0_97, %c0_98] : memref<11x2x4xf32, #tpu.memory_space<vmem>>, vector<1x2x4xf32>
    %444 = vector.shape_cast %443 : vector<1x2x4xf32> to vector<2x4xf32>
    %445 = vector.shape_cast %442 : vector<2x4xf32> to vector<1x2x4xf32>
    tpu.vector_store %arg7[%c8, %c0_97, %c0_98], %445 {strides = array<i32>} : memref<11x2x4xf32, #tpu.memory_space<vmem>>, vector<1x2x4xf32>,
    %446 = tpu.concatenate %441, %418 in 1 : vector<2x32xf32>, vector<2x32xf32> -> vector<2x64xf32>
    %cst_99 = arith.constant dense<0.000000e+00> : vector<2x128xf32>
    %447 = tpu.matmul %446, %0, %cst_99 {dimension_numbers = #tpu.dot_dimension_numbers<[1], [0], [0], [1], [0, 0, 1, 1], [], []>} : vector<2x64xf32>, vector<64x128xf32>, vector<2x128xf32> -> vector<2x128xf32>
    %448 = vector.broadcast %1 : vector<1x128xf32> to vector<2x128xf32>
    %449 = arith.addf %447, %448 : vector<2x128xf32>
    %450 = vector.extract_strided_slice %449 {offsets = [0, 0], sizes = [2, 96], strides = [1, 1]} : vector<2x128xf32> to vector<2x96xf32>
    %451 = arith.negf %450 : vector<2x96xf32>
    %452 = math.exp %451 : vector<2x96xf32>
    %cst_100 = arith.constant 1.000000e+00 : f32
    %453 = vector.broadcast %cst_100 : f32 to vector<2x96xf32>
    %454 = arith.addf %453, %452 : vector<2x96xf32>
    %455 = arith.divf %453, %454 : vector<2x96xf32>
    %456 = vector.extract_strided_slice %449 {offsets = [0, 96], sizes = [2, 32], strides = [1, 1]} : vector<2x128xf32> to vector<2x32xf32>
    %457 = math.tanh %456 : vector<2x32xf32>
    %458 = vector.extract_strided_slice %455 {offsets = [0, 0], sizes = [2, 32], strides = [1, 1]} : vector<2x96xf32> to vector<2x32xf32>
    %459 = vector.extract_strided_slice %455 {offsets = [0, 32], sizes = [2, 32], strides = [1, 1]} : vector<2x96xf32> to vector<2x32xf32>
    %460 = vector.extract_strided_slice %455 {offsets = [0, 64], sizes = [2, 32], strides = [1, 1]} : vector<2x96xf32> to vector<2x32xf32>
    %461 = arith.mulf %459, %416 : vector<2x32xf32>
    %462 = arith.mulf %458, %457 : vector<2x32xf32>
    %463 = arith.addf %461, %462 : vector<2x32xf32>
    %464 = math.tanh %463 : vector<2x32xf32>
    %465 = arith.mulf %460, %464 : vector<2x32xf32>
    %466 = tpu.concatenate %465, %438 in 1 : vector<2x32xf32>, vector<2x32xf32> -> vector<2x64xf32>
    %cst_101 = arith.constant dense<0.000000e+00> : vector<2x128xf32>
    %467 = tpu.matmul %466, %2, %cst_101 {dimension_numbers = #tpu.dot_dimension_numbers<[1], [0], [0], [1], [0, 0, 1, 1], [], []>} : vector<2x64xf32>, vector<64x128xf32>, vector<2x128xf32> -> vector<2x128xf32>
    %468 = vector.broadcast %3 : vector<1x128xf32> to vector<2x128xf32>
    %469 = arith.addf %467, %468 : vector<2x128xf32>
    %470 = vector.extract_strided_slice %469 {offsets = [0, 0], sizes = [2, 96], strides = [1, 1]} : vector<2x128xf32> to vector<2x96xf32>
    %471 = arith.negf %470 : vector<2x96xf32>
    %472 = math.exp %471 : vector<2x96xf32>
    %cst_102 = arith.constant 1.000000e+00 : f32
    %473 = vector.broadcast %cst_102 : f32 to vector<2x96xf32>
    %474 = arith.addf %473, %472 : vector<2x96xf32>
    %475 = arith.divf %473, %474 : vector<2x96xf32>
    %476 = vector.extract_strided_slice %469 {offsets = [0, 96], sizes = [2, 32], strides = [1, 1]} : vector<2x128xf32> to vector<2x32xf32>
    %477 = math.tanh %476 : vector<2x32xf32>
    %478 = vector.extract_strided_slice %475 {offsets = [0, 0], sizes = [2, 32], strides = [1, 1]} : vector<2x96xf32> to vector<2x32xf32>
    %479 = vector.extract_strided_slice %475 {offsets = [0, 32], sizes = [2, 32], strides = [1, 1]} : vector<2x96xf32> to vector<2x32xf32>
    %480 = vector.extract_strided_slice %475 {offsets = [0, 64], sizes = [2, 32], strides = [1, 1]} : vector<2x96xf32> to vector<2x32xf32>
    %481 = arith.mulf %479, %436 : vector<2x32xf32>
    %482 = arith.mulf %478, %477 : vector<2x32xf32>
    %483 = arith.addf %481, %482 : vector<2x32xf32>
    %484 = math.tanh %483 : vector<2x32xf32>
    %485 = arith.mulf %480, %484 : vector<2x32xf32>
    %cst_103 = arith.constant dense<0.000000e+00> : vector<2x32xf32>
    %486 = tpu.matmul %485, %4, %cst_103 {dimension_numbers = #tpu.dot_dimension_numbers<[1], [0], [0], [1], [0, 0, 1, 1], [], []>} : vector<2x32xf32>, vector<32x32xf32>, vector<2x32xf32> -> vector<2x32xf32>
    %487 = vector.broadcast %5 : vector<1x32xf32> to vector<2x32xf32>
    %488 = arith.addf %486, %487 : vector<2x32xf32>
    %489 = vector.extract_strided_slice %488 {offsets = [0, 0], sizes = [2, 4], strides = [1, 1]} : vector<2x32xf32> to vector<2x4xf32>
    %c9 = arith.constant 9 : index
    %c0_104 = arith.constant 0 : index
    %c0_105 = arith.constant 0 : index
    %490 = vector.load %arg7[%c9, %c0_104, %c0_105] : memref<11x2x4xf32, #tpu.memory_space<vmem>>, vector<1x2x4xf32>
    %491 = vector.shape_cast %490 : vector<1x2x4xf32> to vector<2x4xf32>
    %492 = vector.shape_cast %489 : vector<2x4xf32> to vector<1x2x4xf32>
    tpu.vector_store %arg7[%c9, %c0_104, %c0_105], %492 {strides = array<i32>} : memref<11x2x4xf32, #tpu.memory_space<vmem>>, vector<1x2x4xf32>,
    %493 = tpu.concatenate %488, %465 in 1 : vector<2x32xf32>, vector<2x32xf32> -> vector<2x64xf32>
    %cst_106 = arith.constant dense<0.000000e+00> : vector<2x128xf32>
    %494 = tpu.matmul %493, %0, %cst_106 {dimension_numbers = #tpu.dot_dimension_numbers<[1], [0], [0], [1], [0, 0, 1, 1], [], []>} : vector<2x64xf32>, vector<64x128xf32>, vector<2x128xf32> -> vector<2x128xf32>
    %495 = vector.broadcast %1 : vector<1x128xf32> to vector<2x128xf32>
    %496 = arith.addf %494, %495 : vector<2x128xf32>
    %497 = vector.extract_strided_slice %496 {offsets = [0, 0], sizes = [2, 96], strides = [1, 1]} : vector<2x128xf32> to vector<2x96xf32>
    %498 = arith.negf %497 : vector<2x96xf32>
    %499 = math.exp %498 : vector<2x96xf32>
    %cst_107 = arith.constant 1.000000e+00 : f32
    %500 = vector.broadcast %cst_107 : f32 to vector<2x96xf32>
    %501 = arith.addf %500, %499 : vector<2x96xf32>
    %502 = arith.divf %500, %501 : vector<2x96xf32>
    %503 = vector.extract_strided_slice %496 {offsets = [0, 96], sizes = [2, 32], strides = [1, 1]} : vector<2x128xf32> to vector<2x32xf32>
    %504 = math.tanh %503 : vector<2x32xf32>
    %505 = vector.extract_strided_slice %502 {offsets = [0, 0], sizes = [2, 32], strides = [1, 1]} : vector<2x96xf32> to vector<2x32xf32>
    %506 = vector.extract_strided_slice %502 {offsets = [0, 32], sizes = [2, 32], strides = [1, 1]} : vector<2x96xf32> to vector<2x32xf32>
    %507 = vector.extract_strided_slice %502 {offsets = [0, 64], sizes = [2, 32], strides = [1, 1]} : vector<2x96xf32> to vector<2x32xf32>
    %508 = arith.mulf %506, %463 : vector<2x32xf32>
    %509 = arith.mulf %505, %504 : vector<2x32xf32>
    %510 = arith.addf %508, %509 : vector<2x32xf32>
    %511 = math.tanh %510 : vector<2x32xf32>
    %512 = arith.mulf %507, %511 : vector<2x32xf32>
    %513 = tpu.concatenate %512, %485 in 1 : vector<2x32xf32>, vector<2x32xf32> -> vector<2x64xf32>
    %cst_108 = arith.constant dense<0.000000e+00> : vector<2x128xf32>
    %514 = tpu.matmul %513, %2, %cst_108 {dimension_numbers = #tpu.dot_dimension_numbers<[1], [0], [0], [1], [0, 0, 1, 1], [], []>} : vector<2x64xf32>, vector<64x128xf32>, vector<2x128xf32> -> vector<2x128xf32>
    %515 = vector.broadcast %3 : vector<1x128xf32> to vector<2x128xf32>
    %516 = arith.addf %514, %515 : vector<2x128xf32>
    %517 = vector.extract_strided_slice %516 {offsets = [0, 0], sizes = [2, 96], strides = [1, 1]} : vector<2x128xf32> to vector<2x96xf32>
    %518 = arith.negf %517 : vector<2x96xf32>
    %519 = math.exp %518 : vector<2x96xf32>
    %cst_109 = arith.constant 1.000000e+00 : f32
    %520 = vector.broadcast %cst_109 : f32 to vector<2x96xf32>
    %521 = arith.addf %520, %519 : vector<2x96xf32>
    %522 = arith.divf %520, %521 : vector<2x96xf32>
    %523 = vector.extract_strided_slice %516 {offsets = [0, 96], sizes = [2, 32], strides = [1, 1]} : vector<2x128xf32> to vector<2x32xf32>
    %524 = math.tanh %523 : vector<2x32xf32>
    %525 = vector.extract_strided_slice %522 {offsets = [0, 0], sizes = [2, 32], strides = [1, 1]} : vector<2x96xf32> to vector<2x32xf32>
    %526 = vector.extract_strided_slice %522 {offsets = [0, 32], sizes = [2, 32], strides = [1, 1]} : vector<2x96xf32> to vector<2x32xf32>
    %527 = vector.extract_strided_slice %522 {offsets = [0, 64], sizes = [2, 32], strides = [1, 1]} : vector<2x96xf32> to vector<2x32xf32>
    %528 = arith.mulf %526, %483 : vector<2x32xf32>
    %529 = arith.mulf %525, %524 : vector<2x32xf32>
    %530 = arith.addf %528, %529 : vector<2x32xf32>
    %531 = math.tanh %530 : vector<2x32xf32>
    %532 = arith.mulf %527, %531 : vector<2x32xf32>
    %cst_110 = arith.constant dense<0.000000e+00> : vector<2x32xf32>
    %533 = tpu.matmul %532, %4, %cst_110 {dimension_numbers = #tpu.dot_dimension_numbers<[1], [0], [0], [1], [0, 0, 1, 1], [], []>} : vector<2x32xf32>, vector<32x32xf32>, vector<2x32xf32> -> vector<2x32xf32>
    %534 = vector.broadcast %5 : vector<1x32xf32> to vector<2x32xf32>
    %535 = arith.addf %533, %534 : vector<2x32xf32>
    %536 = vector.extract_strided_slice %535 {offsets = [0, 0], sizes = [2, 4], strides = [1, 1]} : vector<2x32xf32> to vector<2x4xf32>
    %c10 = arith.constant 10 : index
    %c0_111 = arith.constant 0 : index
    %c0_112 = arith.constant 0 : index
    %537 = vector.load %arg7[%c10, %c0_111, %c0_112] : memref<11x2x4xf32, #tpu.memory_space<vmem>>, vector<1x2x4xf32>
    %538 = vector.shape_cast %537 : vector<1x2x4xf32> to vector<2x4xf32>
    %539 = vector.shape_cast %536 : vector<2x4xf32> to vector<1x2x4xf32>
    tpu.vector_store %arg7[%c10, %c0_111, %c0_112], %539 {strides = array<i32>} : memref<11x2x4xf32, #tpu.memory_space<vmem>>, vector<1x2x4xf32>,
    return
  }
}

</mosaic_0001>

<llo_original>
// kernel: tpu_custom_call.1
$region0: #{tpu_custom_call.1}
  #allocation0 [shape = 'u32[]', space=smem, size = 0x4, offset = 0x4, fixed_abs, tag = 'smem constant byte address 0x4 - core index']
  #allocation1 [shape = 'u32[72,128]{1,0:T(1,128)}', space=vmem, size = 0x9000, scoped, tag = 'internal scratch']
  %s0 = inlined_call_operand.hbm [shape: f32[8,2,32], index: 0, kind: input, shape index: {}]
  %s1 = inlined_call_operand.hbm [shape: f32[64,128], index: 1, kind: input, shape index: {}]
  %s2 = inlined_call_operand.vmem [shape: f32[1,128], index: 2, kind: input, shape index: {}]
  %s3 = inlined_call_operand.hbm [shape: f32[64,128], index: 3, kind: input, shape index: {}]
  %s4 = inlined_call_operand.vmem [shape: f32[1,128], index: 4, kind: input, shape index: {}]
  %s5 = inlined_call_operand.hbm [shape: f32[32,32], index: 5, kind: input, shape index: {}]
  %s6 = inlined_call_operand.vmem [shape: f32[1,32], index: 6, kind: input, shape index: {}]
  %s7 = inlined_call_operand.vmem [shape: f32[11,2,4], index: 7, kind: output, shape index: {}]
  %s8 = sld [smem:[#allocation0]]
  $region54: #{tpu_custom_call.1} parent=0
    _
  %s10 = ssub.s32 1, %s8
  %s11 = scalar_select 0, %s10, %s8
  $region1: #{tpu_custom_call.1} parent=0
    #allocation2 [shape = 'u8[8192]{0}', space=vmem, size = 0x2000, scoped, tag = 'input window, operand 0, single buffered']
    #allocation3 [shape = 's32[1]{0}', space=sflag, size = 0x4, scoped, tag = 'scoped memory for tpu_custom_call.1']
    #allocation4 [shape = 'u8[32768]{0}', space=vmem, size = 0x8000, scoped, tag = 'input window, operand 1, single buffered']
    #allocation5 [shape = 's32[1]{0}', space=sflag, size = 0x4, scoped, tag = 'scoped memory for tpu_custom_call.1']
    #allocation6 [shape = 'u8[32768]{0}', space=vmem, size = 0x8000, scoped, tag = 'input window, operand 3, single buffered']
    #allocation7 [shape = 'u8[16384]{0}', space=vmem, size = 0x4000, scoped, tag = 'input window, operand 5, single buffered']
    #allocation8 [shape = 's32[1]{0}', space=sflag, size = 0x4, scoped, tag = 'scoped memory for tpu_custom_call.1']
    %12 = vsyncpa [#allocation3], 0
    %13 = vsyncpa [#allocation5], 0
    %14 = vsyncpa [#allocation8], 0
    // Predicated region
    $region2: #{tpu_custom_call.1} parent=1 // pred_check
      _
    $region3: #{tpu_custom_call.1} parent=1 // pred_check_branch
      %16 = sbr.rel (0) target = $region5
    $region4: #{tpu_custom_call.1} parent=1 // pred_region
      %18 = vsyncadd [#allocation3], 0
      %s19 = sshll.u32 %s0, 4
      %s20 = int_to_ptr.hbm [resolvable:$true] %s19
      %s21 = sshll.u32 [#allocation2], 4
      %s22 = int_to_ptr.vmem [resolvable:$true] %s21
      %27 = dma.hbm_to_vmem [thread:$0]  %s20, 256, %s22, [#allocation3], 32, 32, 2
    $region5: #{tpu_custom_call.1} parent=1 // pred_fallthru
      _
    // Predicated region
    $region6: #{tpu_custom_call.1} parent=1 // pred_check
      _
    $region7: #{tpu_custom_call.1} parent=1 // pred_check_branch
      %29 = sbr.rel (0) target = $region9
    $region8: #{tpu_custom_call.1} parent=1 // pred_region
      %31 = vsyncadd [#allocation5], 0
      %s32 = sshll.u32 %s1, 4
      %s33 = int_to_ptr.hbm [resolvable:$true] %s32
      %s34 = sshll.u32 [#allocation4], 4
      %s35 = int_to_ptr.vmem [resolvable:$true] %s34
      %40 = dma.hbm_to_vmem [thread:$0]  %s33, 1024, %s35, [#allocation5], 128, 128, 8
    $region9: #{tpu_custom_call.1} parent=1 // pred_fallthru
      _
    // Predicated region
    $region10: #{tpu_custom_call.1} parent=1 // pred_check
      _
    $region11: #{tpu_custom_call.1} parent=1 // pred_check_branch
      %42 = sbr.rel (0) target = $region13
    $region12: #{tpu_custom_call.1} parent=1 // pred_region
      _
    $region13: #{tpu_custom_call.1} parent=1 // pred_fallthru
      _
    // Predicated region
    $region14: #{tpu_custom_call.1} parent=1 // pred_check
      _
    $region15: #{tpu_custom_call.1} parent=1 // pred_check_branch
      %44 = sbr.rel (0) target = $region17
    $region16: #{tpu_custom_call.1} parent=1 // pred_region
      %46 = vsyncadd [#allocation5], 0
      %s47 = sshll.u32 %s3, 4
      %s48 = int_to_ptr.hbm [resolvable:$true] %s47
      %s49 = sshll.u32 [#allocation6], 4
      %s50 = int_to_ptr.vmem [resolvable:$true] %s49
      %55 = dma.hbm_to_vmem [thread:$0]  %s48, 1024, %s50, [#allocation5], 128, 128, 8
    $region17: #{tpu_custom_call.1} parent=1 // pred_fallthru
      _
    // Predicated region
    $region18: #{tpu_custom_call.1} parent=1 // pred_check
      _
    $region19: #{tpu_custom_call.1} parent=1 // pred_check_branch
      %57 = sbr.rel (0) target = $region21
    $region20: #{tpu_custom_call.1} parent=1 // pred_region
      _
    $region21: #{tpu_custom_call.1} parent=1 // pred_fallthru
      _
    // Predicated region
    $region22: #{tpu_custom_call.1} parent=1 // pred_check
      _
    $region23: #{tpu_custom_call.1} parent=1 // pred_check_branch
      %59 = sbr.rel (0) target = $region25
    $region24: #{tpu_custom_call.1} parent=1 // pred_region
      %61 = vsyncadd [#allocation8], 0
      %s62 = sshll.u32 %s5, 4
      %s63 = int_to_ptr.hbm [resolvable:$true] %s62
      %s64 = sshll.u32 [#allocation7], 4
      %s65 = int_to_ptr.vmem [resolvable:$true] %s64
      %70 = dma.hbm_to_vmem [thread:$0]  %s63, 512, %s65, [#allocation8], 128, 128, 8
    $region25: #{tpu_custom_call.1} parent=1 // pred_fallthru
      _
    // Predicated region
    $region26: #{tpu_custom_call.1} parent=1 // pred_check
      _
    $region27: #{tpu_custom_call.1} parent=1 // pred_check_branch
      %72 = sbr.rel (0) target = $region29
    $region28: #{tpu_custom_call.1} parent=1 // pred_region
      _
    $region29: #{tpu_custom_call.1} parent=1 // pred_fallthru
      _
    // Predicated region
    $region30: #{tpu_custom_call.1} parent=1 // pred_check
      _
    $region31: #{tpu_custom_call.1} parent=1 // pred_check_branch
      %74 = sbr.rel (0) target = $region33
    $region32: #{tpu_custom_call.1} parent=1 // pred_region
      %76 = dma.done [#allocation3], 256
    $region33: #{tpu_custom_call.1} parent=1 // pred_fallthru
      _
    // Predicated region
    $region34: #{tpu_custom_call.1} parent=1 // pred_check
      _
    $region35: #{tpu_custom_call.1} parent=1 // pred_check_branch
      %78 = sbr.rel (0) target = $region37
    $region36: #{tpu_custom_call.1} parent=1 // pred_region
      %80 = dma.done [#allocation5], 1024
    $region37: #{tpu_custom_call.1} parent=1 // pred_fallthru
      _
    // Predicated region
    $region38: #{tpu_custom_call.1} parent=1 // pred_check
      _
    $region39: #{tpu_custom_call.1} parent=1 // pred_check_branch
      %82 = sbr.rel (0) target = $region41
    $region40: #{tpu_custom_call.1} parent=1 // pred_region
      %84 = dma.done [#allocation5], 1024
    $region41: #{tpu_custom_call.1} parent=1 // pred_fallthru
      _
    // Predicated region
    $region42: #{tpu_custom_call.1} parent=1 // pred_check
      _
    $region43: #{tpu_custom_call.1} parent=1 // pred_check_branch
      %86 = sbr.rel (0) target = $region45
    $region44: #{tpu_custom_call.1} parent=1 // pred_region
      %88 = dma.done [#allocation8], 512
    $region45: #{tpu_custom_call.1} parent=1 // pred_fallthru
      _
    %v89 = vld [vmem:[#allocation4] sm:$0xff]
    %v90 = vld [vmem:[#allocation4 + $0x8] sm:$0xff]
    %v91 = vld [vmem:[#allocation4 + $0x10] sm:$0xff]
    %v92 = vld [vmem:[#allocation4 + $0x18] sm:$0xff]
    %v93 = vld [vmem:[#allocation4 + $0x20] sm:$0xff]
    %v94 = vld [vmem:[#allocation4 + $0x28] sm:$0xff]
    %v95 = vld [vmem:[#allocation4 + $0x30] sm:$0xff]
    %v96 = vld [vmem:[#allocation4 + $0x38] sm:$0xff]
    %v97 = vld [vmem:[%s2] sm:$0x1]
    %v98 = vld [vmem:[#allocation6] sm:$0xff]
    %v99 = vld [vmem:[#allocation6 + $0x8] sm:$0xff]
    %v100 = vld [vmem:[#allocation6 + $0x10] sm:$0xff]
    %v101 = vld [vmem:[#allocation6 + $0x18] sm:$0xff]
    %v102 = vld [vmem:[#allocation6 + $0x20] sm:$0xff]
    %v103 = vld [vmem:[#allocation6 + $0x28] sm:$0xff]
    %v104 = vld [vmem:[#allocation6 + $0x30] sm:$0xff]
    %v105 = vld [vmem:[#allocation6 + $0x38] sm:$0xff]
    %v106 = vld [vmem:[%s4] sm:$0x1]
    %v107 = vld [vmem:[#allocation7] sm:$0xff]
    %v108 = vld [vmem:[#allocation7 + $0x8] sm:$0xff]
    %v109 = vld [vmem:[#allocation7 + $0x10] sm:$0xff]
    %v110 = vld [vmem:[#allocation7 + $0x18] sm:$0xff]
    %v111 = vld [vmem:[%s6] sm:$0x1]
    %v112 = vld [vmem:[#allocation2] sm:$0x3]
    %vm113 = vcmask 261120
    %v114 = vsel %vm113, %v112, 0.0
    %v116 = vperm.slane %v97, 0
    %vm118 = vcmask 523264
    %v120 = vsel %vm118, %v114, 0
    %122 = vmatpush.msra.mxu0 0.0
    %123 = vmatpush.msra.mxu0 0.0
    %124 = vmatpush.msra.mxu0 0.0
    %125 = vmatpush.msra.mxu0 0.0
    %126 = vmatpush.msra.mxu0 0.0
    %127 = vmatpush.msra.mxu0 0.0
    %128 = vmatpush.msra.mxu0 0.0
    %129 = vmatpush.msra.mxu0 0.0
    %130 = vmatpush.msra.mxu0 %v96
    %131 = vmatpush.msra.mxu0 %v95
    %132 = vmatpush.msra.mxu0 %v94
    %133 = vmatpush.msra.mxu0 %v93
    %134 = vmatpush.msra.mxu0 %v92
    %135 = vmatpush.msra.mxu0 %v91
    %136 = vmatpush.msra.mxu0 %v90
    %137 = vmatpush.msra.mxu0 %v89
    %138 = vmatmul.f32.gmra.mxu0 %v120
    %v139 = vpop.f32.mrf.mxu0
    %v140 = vadd.f32 %v116, %v139
    %141 = vdwg.mxu0
    %v142 = vxor.u32 %v140, 2147483648
    %v143 = vmul.f32 %v142, 1.442695
    %v144 = vpow.pop %v143
    %v145 = vadd.f32 %v144, 1.0
    %v146 = vrcp.pop %v145
    %v147 = vmul.f32 %v145, %v146
    %v148 = vsub.f32 1.0, %v147
    %v149 = vmul.f32 %v146, %v148
    %v150 = vadd.f32 %v146, %v149
    %vm151 = vweird.f32 %v145
    %vm152 = vweird.f32 %v146
    %vm153 = vmor %vm151, %vm152
    %v154 = vsel %vm153, %v146, %v150
    %v155 = vand.u32 2147483647, %v145
    %vm156 = vcmp.eq.f32.partialorder %v155, 8.507059e+37
    %v157 = vand.u32 %v145, 2147483648
    %v158 = vor.u32 1.1754944e-38, %v157
    %v159 = vsel %vm156, %v158, %v154
    %v160 = vmul.f32 1.0, %v159
    %v161 = vtanh.pop %v140
    %v162 = vmul.f32 %v160, 0.0
    %164 = vrot.lane.b32.xlu0 %v161, 32
    %v165 = vpop.permute.xlu0 %164
    %v167 = vmul.f32 %v160, %v165
    %169 = vrot.lane.b32.xlu0 %v167, 32
    %v170 = vpop.permute.xlu0 %169
    %v172 = vadd.f32 %v162, %v170
    %v173 = vtanh.pop %v172
    %175 = vrot.lane.b32.xlu0 %v173, 32
    %v176 = vpop.permute.xlu0 %175
    %v178 = vmul.f32 %v160, %v176
    %180 = vrot.lane.b32.xlu0 %v178, 64
    %v181 = vpop.permute.xlu0 %180
    %v183 = vsel %vm113, %v181, 0.0
    %v185 = vperm.slane %v106, 0
    %v188 = vsel %vm118, %v183, 0
    %190 = vmatpush.msra.mxu0 0.0
    %191 = vmatpush.msra.mxu0 0.0
    %192 = vmatpush.msra.mxu0 0.0
    %193 = vmatpush.msra.mxu0 0.0
    %194 = vmatpush.msra.mxu0 0.0
    %195 = vmatpush.msra.mxu0 0.0
    %196 = vmatpush.msra.mxu0 0.0
    %197 = vmatpush.msra.mxu0 0.0
    %198 = vmatpush.msra.mxu0 %v105
    %199 = vmatpush.msra.mxu0 %v104
    %200 = vmatpush.msra.mxu0 %v103
    %201 = vmatpush.msra.mxu0 %v102
    %202 = vmatpush.msra.mxu0 %v101
    %203 = vmatpush.msra.mxu0 %v100
    %204 = vmatpush.msra.mxu0 %v99
    %205 = vmatpush.msra.mxu0 %v98
    %206 = vmatmul.f32.gmra.mxu0 %v188
    %v207 = vpop.f32.mrf.mxu0
    %v208 = vadd.f32 %v185, %v207
    %209 = vdwg.mxu0
    %v210 = vxor.u32 %v208, 2147483648
    %v211 = vmul.f32 %v210, 1.442695
    %v212 = vpow.pop %v211
    %v213 = vadd.f32 %v212, 1.0
    %v214 = vrcp.pop %v213
    %v215 = vmul.f32 %v213, %v214
    %v216 = vsub.f32 1.0, %v215
    %v217 = vmul.f32 %v214, %v216
    %v218 = vadd.f32 %v214, %v217
    %vm219 = vweird.f32 %v213
    %vm220 = vweird.f32 %v214
    %vm221 = vmor %vm219, %vm220
    %v222 = vsel %vm221, %v214, %v218
    %v223 = vand.u32 2147483647, %v213
    %vm224 = vcmp.eq.f32.partialorder %v223, 8.507059e+37
    %v225 = vand.u32 %v213, 2147483648
    %v226 = vor.u32 1.1754944e-38, %v225
    %v227 = vsel %vm224, %v226, %v222
    %v228 = vmul.f32 1.0, %v227
    %v229 = vtanh.pop %v208
    %v230 = vmul.f32 %v228, 0.0
    %232 = vrot.lane.b32.xlu0 %v229, 32
    %v233 = vpop.permute.xlu0 %232
    %v235 = vmul.f32 %v228, %v233
    %237 = vrot.lane.b32.xlu0 %v235, 32
    %v238 = vpop.permute.xlu0 %237
    %v240 = vadd.f32 %v230, %v238
    %v241 = vtanh.pop %v240
    %243 = vrot.lane.b32.xlu0 %v241, 32
    %v244 = vpop.permute.xlu0 %243
    %v246 = vmul.f32 %v228, %v244
    %v248 = vperm.slane %v111, 0
    %251 = vrot.lane.b32.xlu0 %v246, 64
    %v252 = vpop.permute.xlu0 %251
    %v253 = vsel %vm113, %v252, 0
    %255 = vmatpush.msra.mxu0 0.0
    %256 = vmatpush.msra.mxu0 0.0
    %257 = vmatpush.msra.mxu0 0.0
    %258 = vmatpush.msra.mxu0 0.0
    %259 = vmatpush.msra.mxu0 0.0
    %260 = vmatpush.msra.mxu0 0.0
    %261 = vmatpush.msra.mxu0 0.0
    %262 = vmatpush.msra.mxu0 0.0
    %263 = vmatpush.msra.mxu0 0.0
    %264 = vmatpush.msra.mxu0 0.0
    %265 = vmatpush.msra.mxu0 0.0
    %266 = vmatpush.msra.mxu0 0.0
    %267 = vmatpush.msra.mxu0 %v110
    %268 = vmatpush.msra.mxu0 %v109
    %269 = vmatpush.msra.mxu0 %v108
    %270 = vmatpush.msra.mxu0 %v107
    %271 = vmatmul.f32.gmra.mxu0 %v253
    %v272 = vpop.f32.mrf.mxu0
    %v273 = vadd.f32 %v248, %v272
    %274 = vdwg.mxu0
    %vm275 = vcmask 25600
    %276 = vst.msk [vmem:[%s7] sm:$0x3] %vm275, %v273
    %s277 = scalar_lea.vmem [#allocation2], 2
    %v278 = vld [vmem:[%s277] sm:$0x3]
    %279 = vrot.lane.b32.xlu0 %v178, 96
    %v280 = vpop.permute.xlu0 %279
    %v282 = vsel %vm113, %v278, %v280
    %v284 = vsel %vm118, %v282, 0
    %286 = vmatpush.msra.mxu0 0.0
    %287 = vmatpush.msra.mxu0 0.0
    %288 = vmatpush.msra.mxu0 0.0
    %289 = vmatpush.msra.mxu0 0.0
    %290 = vmatpush.msra.mxu0 0.0
    %291 = vmatpush.msra.mxu0 0.0
    %292 = vmatpush.msra.mxu0 0.0
    %293 = vmatpush.msra.mxu0 0.0
    %294 = vmatpush.msra.mxu0 %v96
    %295 = vmatpush.msra.mxu0 %v95
    %296 = vmatpush.msra.mxu0 %v94
    %297 = vmatpush.msra.mxu0 %v93
    %298 = vmatpush.msra.mxu0 %v92
    %299 = vmatpush.msra.mxu0 %v91
    %300 = vmatpush.msra.mxu0 %v90
    %301 = vmatpush.msra.mxu0 %v89
    %302 = vmatmul.f32.gmra.mxu0 %v284
    %v303 = vpop.f32.mrf.mxu0
    %v304 = vadd.f32 %v116, %v303
    %305 = vdwg.mxu0
    %v306 = vxor.u32 %v304, 2147483648
    %v307 = vmul.f32 %v306, 1.442695
    %v308 = vpow.pop %v307
    %v309 = vadd.f32 %v308, 1.0
    %v310 = vrcp.pop %v309
    %v311 = vmul.f32 %v309, %v310
    %v312 = vsub.f32 1.0, %v311
    %v313 = vmul.f32 %v310, %v312
    %v314 = vadd.f32 %v310, %v313
    %vm315 = vweird.f32 %v309
    %vm316 = vweird.f32 %v310
    %vm317 = vmor %vm315, %vm316
    %v318 = vsel %vm317, %v310, %v314
    %v319 = vand.u32 2147483647, %v309
    %vm320 = vcmp.eq.f32.partialorder %v319, 8.507059e+37
    %v321 = vand.u32 %v309, 2147483648
    %v322 = vor.u32 1.1754944e-38, %v321
    %v323 = vsel %vm320, %v322, %v318
    %v324 = vmul.f32 1.0, %v323
    %v325 = vtanh.pop %v304
    %v326 = vmul.f32 %v324, %v172
    %328 = vrot.lane.b32.xlu0 %v325, 32
    %v329 = vpop.permute.xlu0 %328
    %v331 = vmul.f32 %v324, %v329
    %333 = vrot.lane.b32.xlu0 %v331, 32
    %v334 = vpop.permute.xlu0 %333
    %v336 = vadd.f32 %v326, %v334
    %v337 = vtanh.pop %v336
    %339 = vrot.lane.b32.xlu0 %v337, 32
    %v340 = vpop.permute.xlu0 %339
    %v342 = vmul.f32 %v324, %v340
    %344 = vrot.lane.b32.xlu0 %v342, 64
    %v345 = vpop.permute.xlu0 %344
    %347 = vrot.lane.b32.xlu0 %v246, 96
    %v348 = vpop.permute.xlu0 %347
    %v350 = vsel %vm113, %v345, %v348
    %v352 = vsel %vm118, %v350, 0
    %354 = vmatpush.msra.mxu0 0.0
    %355 = vmatpush.msra.mxu0 0.0
    %356 = vmatpush.msra.mxu0 0.0
    %357 = vmatpush.msra.mxu0 0.0
    %358 = vmatpush.msra.mxu0 0.0
    %359 = vmatpush.msra.mxu0 0.0
    %360 = vmatpush.msra.mxu0 0.0
    %361 = vmatpush.msra.mxu0 0.0
    %362 = vmatpush.msra.mxu0 %v105
    %363 = vmatpush.msra.mxu0 %v104
    %364 = vmatpush.msra.mxu0 %v103
    %365 = vmatpush.msra.mxu0 %v102
    %366 = vmatpush.msra.mxu0 %v101
    %367 = vmatpush.msra.mxu0 %v100
    %368 = vmatpush.msra.mxu0 %v99
    %369 = vmatpush.msra.mxu0 %v98
    %370 = vmatmul.f32.gmra.mxu0 %v352
    %v371 = vpop.f32.mrf.mxu0
    %v372 = vadd.f32 %v185, %v371
    %373 = vdwg.mxu0
    %v374 = vxor.u32 %v372, 2147483648
    %v375 = vmul.f32 %v374, 1.442695
    %v376 = vpow.pop %v375
    %v377 = vadd.f32 %v376, 1.0
    %v378 = vrcp.pop %v377
    %v379 = vmul.f32 %v377, %v378
    %v380 = vsub.f32 1.0, %v379
    %v381 = vmul.f32 %v378, %v380
    %v382 = vadd.f32 %v378, %v381
    %vm383 = vweird.f32 %v377
    %vm384 = vweird.f32 %v378
    %vm385 = vmor %vm383, %vm384
    %v386 = vsel %vm385, %v378, %v382
    %v387 = vand.u32 2147483647, %v377
    %vm388 = vcmp.eq.f32.partialorder %v387, 8.507059e+37
    %v389 = vand.u32 %v377, 2147483648
    %v390 = vor.u32 1.1754944e-38, %v389
    %v391 = vsel %vm388, %v390, %v386
    %v392 = vmul.f32 1.0, %v391
    %v393 = vtanh.pop %v372
    %v394 = vmul.f32 %v392, %v240
    %396 = vrot.lane.b32.xlu0 %v393, 32
    %v397 = vpop.permute.xlu0 %396
    %v399 = vmul.f32 %v392, %v397
    %401 = vrot.lane.b32.xlu0 %v399, 32
    %v402 = vpop.permute.xlu0 %401
    %v404 = vadd.f32 %v394, %v402
    %v405 = vtanh.pop %v404
    %407 = vrot.lane.b32.xlu0 %v405, 32
    %v408 = vpop.permute.xlu0 %407
    %v410 = vmul.f32 %v392, %v408
    %412 = vrot.lane.b32.xlu0 %v410, 64
    %v413 = vpop.permute.xlu0 %412
    %v414 = vsel %vm113, %v413, 0
    %416 = vmatpush.msra.mxu0 0.0
    %417 = vmatpush.msra.mxu0 0.0
    %418 = vmatpush.msra.mxu0 0.0
    %419 = vmatpush.msra.mxu0 0.0
    %420 = vmatpush.msra.mxu0 0.0
    %421 = vmatpush.msra.mxu0 0.0
    %422 = vmatpush.msra.mxu0 0.0
    %423 = vmatpush.msra.mxu0 0.0
    %424 = vmatpush.msra.mxu0 0.0
    %425 = vmatpush.msra.mxu0 0.0
    %426 = vmatpush.msra.mxu0 0.0
    %427 = vmatpush.msra.mxu0 0.0
    %428 = vmatpush.msra.mxu0 %v110
    %429 = vmatpush.msra.mxu0 %v109
    %430 = vmatpush.msra.mxu0 %v108
    %431 = vmatpush.msra.mxu0 %v107
    %432 = vmatmul.f32.gmra.mxu0 %v414
    %v433 = vpop.f32.mrf.mxu0
    %v434 = vadd.f32 %v248, %v433
    %435 = vdwg.mxu0
    %s436 = scalar_lea.vmem %s7, 2
    %437 = vst.msk [vmem:[%s436] sm:$0x3] %vm275, %v434
    %s438 = scalar_lea.vmem [#allocation2], 4
    %v439 = vld [vmem:[%s438] sm:$0x3]
    %440 = vrot.lane.b32.xlu0 %v342, 96
    %v441 = vpop.permute.xlu0 %440
    %v443 = vsel %vm113, %v439, %v441
    %v445 = vsel %vm118, %v443, 0
    %447 = vmatpush.msra.mxu0 0.0
    %448 = vmatpush.msra.mxu0 0.0
    %449 = vmatpush.msra.mxu0 0.0
    %450 = vmatpush.msra.mxu0 0.0
    %451 = vmatpush.msra.mxu0 0.0
    %452 = vmatpush.msra.mxu0 0.0
    %453 = vmatpush.msra.mxu0 0.0
    %454 = vmatpush.msra.mxu0 0.0
    %455 = vmatpush.msra.mxu0 %v96
    %456 = vmatpush.msra.mxu0 %v95
    %457 = vmatpush.msra.mxu0 %v94
    %458 = vmatpush.msra.mxu0 %v93
    %459 = vmatpush.msra.mxu0 %v92
    %460 = vmatpush.msra.mxu0 %v91
    %461 = vmatpush.msra.mxu0 %v90
    %462 = vmatpush.msra.mxu0 %v89
    %463 = vmatmul.f32.gmra.mxu0 %v445
    %v464 = vpop.f32.mrf.mxu0
    %v465 = vadd.f32 %v116, %v464
    %466 = vdwg.mxu0
    %v467 = vxor.u32 %v465, 2147483648
    %v468 = vmul.f32 %v467, 1.442695
    %v469 = vpow.pop %v468
    %v470 = vadd.f32 %v469, 1.0
    %v471 = vrcp.pop %v470
    %v472 = vmul.f32 %v470, %v471
    %v473 = vsub.f32 1.0, %v472
    %v474 = vmul.f32 %v471, %v473
    %v475 = vadd.f32 %v471, %v474
    %vm476 = vweird.f32 %v470
    %vm477 = vweird.f32 %v471
    %vm478 = vmor %vm476, %vm477
    %v479 = vsel %vm478, %v471, %v475
    %v480 = vand.u32 2147483647, %v470
    %vm481 = vcmp.eq.f32.partialorder %v480, 8.507059e+37
    %v482 = vand.u32 %v470, 2147483648
    %v483 = vor.u32 1.1754944e-38, %v482
    %v484 = vsel %vm481, %v483, %v479
    %v485 = vmul.f32 1.0, %v484
    %v486 = vtanh.pop %v465
    %v487 = vmul.f32 %v485, %v336
    %489 = vrot.lane.b32.xlu0 %v486, 32
    %v490 = vpop.permute.xlu0 %489
    %v492 = vmul.f32 %v485, %v490
    %494 = vrot.lane.b32.xlu0 %v492, 32
    %v495 = vpop.permute.xlu0 %494
    %v497 = vadd.f32 %v487, %v495
    %v498 = vtanh.pop %v497
    %500 = vrot.lane.b32.xlu0 %v498, 32
    %v501 = vpop.permute.xlu0 %500
    %v503 = vmul.f32 %v485, %v501
    %505 = vrot.lane.b32.xlu0 %v503, 64
    %v506 = vpop.permute.xlu0 %505
    %508 = vrot.lane.b32.xlu0 %v410, 96
    %v509 = vpop.permute.xlu0 %508
    %v511 = vsel %vm113, %v506, %v509
    %v513 = vsel %vm118, %v511, 0
    %515 = vmatpush.msra.mxu0 0.0
    %516 = vmatpush.msra.mxu0 0.0
    %517 = vmatpush.msra.mxu0 0.0
    %518 = vmatpush.msra.mxu0 0.0
    %519 = vmatpush.msra.mxu0 0.0
    %520 = vmatpush.msra.mxu0 0.0
    %521 = vmatpush.msra.mxu0 0.0
    %522 = vmatpush.msra.mxu0 0.0
    %523 = vmatpush.msra.mxu0 %v105
    %524 = vmatpush.msra.mxu0 %v104
    %525 = vmatpush.msra.mxu0 %v103
    %526 = vmatpush.msra.mxu0 %v102
    %527 = vmatpush.msra.mxu0 %v101
    %528 = vmatpush.msra.mxu0 %v100
    %529 = vmatpush.msra.mxu0 %v99
    %530 = vmatpush.msra.mxu0 %v98
    %531 = vmatmul.f32.gmra.mxu0 %v513
    %v532 = vpop.f32.mrf.mxu0
    %v533 = vadd.f32 %v185, %v532
    %534 = vdwg.mxu0
    %v535 = vxor.u32 %v533, 2147483648
    %v536 = vmul.f32 %v535, 1.442695
    %v537 = vpow.pop %v536
    %v538 = vadd.f32 %v537, 1.0
    %v539 = vrcp.pop %v538
    %v540 = vmul.f32 %v538, %v539
    %v541 = vsub.f32 1.0, %v540
    %v542 = vmul.f32 %v539, %v541
    %v543 = vadd.f32 %v539, %v542
    %vm544 = vweird.f32 %v538
    %vm545 = vweird.f32 %v539
    %vm546 = vmor %vm544, %vm545
    %v547 = vsel %vm546, %v539, %v543
    %v548 = vand.u32 2147483647, %v538
    %vm549 = vcmp.eq.f32.partialorder %v548, 8.507059e+37
    %v550 = vand.u32 %v538, 2147483648
    %v551 = vor.u32 1.1754944e-38, %v550
    %v552 = vsel %vm549, %v551, %v547
    %v553 = vmul.f32 1.0, %v552
    %v554 = vtanh.pop %v533
    %v555 = vmul.f32 %v553, %v404
    %557 = vrot.lane.b32.xlu0 %v554, 32
    %v558 = vpop.permute.xlu0 %557
    %v560 = vmul.f32 %v553, %v558
    %562 = vrot.lane.b32.xlu0 %v560, 32
    %v563 = vpop.permute.xlu0 %562
    %v565 = vadd.f32 %v555, %v563
    %v566 = vtanh.pop %v565
    %568 = vrot.lane.b32.xlu0 %v566, 32
    %v569 = vpop.permute.xlu0 %568
    %v571 = vmul.f32 %v553, %v569
    %573 = vrot.lane.b32.xlu0 %v571, 64
    %v574 = vpop.permute.xlu0 %573
    %v575 = vsel %vm113, %v574, 0
    %577 = vmatpush.msra.mxu0 0.0
    %578 = vmatpush.msra.mxu0 0.0
    %579 = vmatpush.msra.mxu0 0.0
    %580 = vmatpush.msra.mxu0 0.0
    %581 = vmatpush.msra.mxu0 0.0
    %582 = vmatpush.msra.mxu0 0.0
    %583 = vmatpush.msra.mxu0 0.0
    %584 = vmatpush.msra.mxu0 0.0
    %585 = vmatpush.msra.mxu0 0.0
    %586 = vmatpush.msra.mxu0 0.0
    %587 = vmatpush.msra.mxu0 0.0
    %588 = vmatpush.msra.mxu0 0.0
    %589 = vmatpush.msra.mxu0 %v110
    %590 = vmatpush.msra.mxu0 %v109
    %591 = vmatpush.msra.mxu0 %v108
    %592 = vmatpush.msra.mxu0 %v107
    %593 = vmatmul.f32.gmra.mxu0 %v575
    %v594 = vpop.f32.mrf.mxu0
    %v595 = vadd.f32 %v248, %v594
    %596 = vdwg.mxu0
    %s597 = scalar_lea.vmem %s7, 4
    %598 = vst.msk [vmem:[%s597] sm:$0x3] %vm275, %v595
    %s599 = scalar_lea.vmem [#allocation2], 6
    %v600 = vld [vmem:[%s599] sm:$0x3]
    %601 = vrot.lane.b32.xlu0 %v503, 96
    %v602 = vpop.permute.xlu0 %601
    %v604 = vsel %vm113, %v600, %v602
    %v606 = vsel %vm118, %v604, 0
    %608 = vmatpush.msra.mxu0 0.0
    %609 = vmatpush.msra.mxu0 0.0
    %610 = vmatpush.msra.mxu0 0.0
    %611 = vmatpush.msra.mxu0 0.0
    %612 = vmatpush.msra.mxu0 0.0
    %613 = vmatpush.msra.mxu0 0.0
    %614 = vmatpush.msra.mxu0 0.0
    %615 = vmatpush.msra.mxu0 0.0
    %616 = vmatpush.msra.mxu0 %v96
    %617 = vmatpush.msra.mxu0 %v95
    %618 = vmatpush.msra.mxu0 %v94
    %619 = vmatpush.msra.mxu0 %v93
    %620 = vmatpush.msra.mxu0 %v92
    %621 = vmatpush.msra.mxu0 %v91
    %622 = vmatpush.msra.mxu0 %v90
    %623 = vmatpush.msra.mxu0 %v89
    %624 = vmatmul.f32.gmra.mxu0 %v606
    %v625 = vpop.f32.mrf.mxu0
    %v626 = vadd.f32 %v116, %v625
    %627 = vdwg.mxu0
    %v628 = vxor.u32 %v626, 2147483648
    %v629 = vmul.f32 %v628, 1.442695
    %v630 = vpow.pop %v629
    %v631 = vadd.f32 %v630, 1.0
    %v632 = vrcp.pop %v631
    %v633 = vmul.f32 %v631, %v632
    %v634 = vsub.f32 1.0, %v633
    %v635 = vmul.f32 %v632, %v634
    %v636 = vadd.f32 %v632, %v635
    %vm637 = vweird.f32 %v631
    %vm638 = vweird.f32 %v632
    %vm639 = vmor %vm637, %vm638
    %v640 = vsel %vm639, %v632, %v636
    %v641 = vand.u32 2147483647, %v631
    %vm642 = vcmp.eq.f32.partialorder %v641, 8.507059e+37
    %v643 = vand.u32 %v631, 2147483648
    %v644 = vor.u32 1.1754944e-38, %v643
    %v645 = vsel %vm642, %v644, %v640
    %v646 = vmul.f32 1.0, %v645
    %v647 = vtanh.pop %v626
    %v648 = vmul.f32 %v646, %v497
    %650 = vrot.lane.b32.xlu0 %v647, 32
    %v651 = vpop.permute.xlu0 %650
    %v653 = vmul.f32 %v646, %v651
    %655 = vrot.lane.b32.xlu0 %v653, 32
    %v656 = vpop.permute.xlu0 %655
    %v658 = vadd.f32 %v648, %v656
    %v659 = vtanh.pop %v658
    %661 = vrot.lane.b32.xlu0 %v659, 32
    %v662 = vpop.permute.xlu0 %661
    %v664 = vmul.f32 %v646, %v662
    %666 = vrot.lane.b32.xlu0 %v664, 64
    %v667 = vpop.permute.xlu0 %666
    %669 = vrot.lane.b32.xlu0 %v571, 96
    %v670 = vpop.permute.xlu0 %669
    %v672 = vsel %vm113, %v667, %v670
    %v674 = vsel %vm118, %v672, 0
    %676 = vmatpush.msra.mxu0 0.0
    %677 = vmatpush.msra.mxu0 0.0
    %678 = vmatpush.msra.mxu0 0.0
    %679 = vmatpush.msra.mxu0 0.0
    %680 = vmatpush.msra.mxu0 0.0
    %681 = vmatpush.msra.mxu0 0.0
    %682 = vmatpush.msra.mxu0 0.0
    %683 = vmatpush.msra.mxu0 0.0
    %684 = vmatpush.msra.mxu0 %v105
    %685 = vmatpush.msra.mxu0 %v104
    %686 = vmatpush.msra.mxu0 %v103
    %687 = vmatpush.msra.mxu0 %v102
    %688 = vmatpush.msra.mxu0 %v101
    %689 = vmatpush.msra.mxu0 %v100
    %690 = vmatpush.msra.mxu0 %v99
    %691 = vmatpush.msra.mxu0 %v98
    %692 = vmatmul.f32.gmra.mxu0 %v674
    %v693 = vpop.f32.mrf.mxu0
    %v694 = vadd.f32 %v185, %v693
    %695 = vdwg.mxu0
    %v696 = vxor.u32 %v694, 2147483648
    %v697 = vmul.f32 %v696, 1.442695
    %v698 = vpow.pop %v697
    %v699 = vadd.f32 %v698, 1.0
    %v700 = vrcp.pop %v699
    %v701 = vmul.f32 %v699, %v700
    %v702 = vsub.f32 1.0, %v701
    %v703 = vmul.f32 %v700, %v702
    %v704 = vadd.f32 %v700, %v703
    %vm705 = vweird.f32 %v699
    %vm706 = vweird.f32 %v700
    %vm707 = vmor %vm705, %vm706
    %v708 = vsel %vm707, %v700, %v704
    %v709 = vand.u32 2147483647, %v699
    %vm710 = vcmp.eq.f32.partialorder %v709, 8.507059e+37
    %v711 = vand.u32 %v699, 2147483648
    %v712 = vor.u32 1.1754944e-38, %v711
    %v713 = vsel %vm710, %v712, %v708
    %v714 = vmul.f32 1.0, %v713
    %v715 = vtanh.pop %v694
    %v716 = vmul.f32 %v714, %v565
    %718 = vrot.lane.b32.xlu0 %v715, 32
    %v719 = vpop.permute.xlu0 %718
    %v721 = vmul.f32 %v714, %v719
    %723 = vrot.lane.b32.xlu0 %v721, 32
    %v724 = vpop.permute.xlu0 %723
    %v726 = vadd.f32 %v716, %v724
    %v727 = vtanh.pop %v726
    %729 = vrot.lane.b32.xlu0 %v727, 32
    %v730 = vpop.permute.xlu0 %729
    %v732 = vmul.f32 %v714, %v730
    %734 = vrot.lane.b32.xlu0 %v732, 64
    %v735 = vpop.permute.xlu0 %734
    %v736 = vsel %vm113, %v735, 0
    %738 = vmatpush.msra.mxu0 0.0
    %739 = vmatpush.msra.mxu0 0.0
    %740 = vmatpush.msra.mxu0 0.0
    %741 = vmatpush.msra.mxu0 0.0
    %742 = vmatpush.msra.mxu0 0.0
    %743 = vmatpush.msra.mxu0 0.0
    %744 = vmatpush.msra.mxu0 0.0
    %745 = vmatpush.msra.mxu0 0.0
    %746 = vmatpush.msra.mxu0 0.0
    %747 = vmatpush.msra.mxu0 0.0
    %748 = vmatpush.msra.mxu0 0.0
    %749 = vmatpush.msra.mxu0 0.0
    %750 = vmatpush.msra.mxu0 %v110
    %751 = vmatpush.msra.mxu0 %v109
    %752 = vmatpush.msra.mxu0 %v108
    %753 = vmatpush.msra.mxu0 %v107
    %754 = vmatmul.f32.gmra.mxu0 %v736
    %v755 = vpop.f32.mrf.mxu0
    %v756 = vadd.f32 %v248, %v755
    %757 = vdwg.mxu0
    %s758 = scalar_lea.vmem %s7, 6
    %759 = vst.msk [vmem:[%s758] sm:$0x3] %vm275, %v756
    %s760 = scalar_lea.vmem [#allocation2], 8
    %v761 = vld [vmem:[%s760] sm:$0x3]
    %762 = vrot.lane.b32.xlu0 %v664, 96
    %v763 = vpop.permute.xlu0 %762
    %v765 = vsel %vm113, %v761, %v763
    %v767 = vsel %vm118, %v765, 0
    %769 = vmatpush.msra.mxu0 0.0
    %770 = vmatpush.msra.mxu0 0.0
    %771 = vmatpush.msra.mxu0 0.0
    %772 = vmatpush.msra.mxu0 0.0
    %773 = vmatpush.msra.mxu0 0.0
    %774 = vmatpush.msra.mxu0 0.0
    %775 = vmatpush.msra.mxu0 0.0
    %776 = vmatpush.msra.mxu0 0.0
    %777 = vmatpush.msra.mxu0 %v96
    %778 = vmatpush.msra.mxu0 %v95
    %779 = vmatpush.msra.mxu0 %v94
    %780 = vmatpush.msra.mxu0 %v93
    %781 = vmatpush.msra.mxu0 %v92
    %782 = vmatpush.msra.mxu0 %v91
    %783 = vmatpush.msra.mxu0 %v90
    %784 = vmatpush.msra.mxu0 %v89
    %785 = vmatmul.f32.gmra.mxu0 %v767
    %v786 = vpop.f32.mrf.mxu0
    %v787 = vadd.f32 %v116, %v786
    %788 = vdwg.mxu0
    %v789 = vxor.u32 %v787, 2147483648
    %v790 = vmul.f32 %v789, 1.442695
    %v791 = vpow.pop %v790
    %v792 = vadd.f32 %v791, 1.0
    %v793 = vrcp.pop %v792
    %v794 = vmul.f32 %v792, %v793
    %v795 = vsub.f32 1.0, %v794
    %v796 = vmul.f32 %v793, %v795
    %v797 = vadd.f32 %v793, %v796
    %vm798 = vweird.f32 %v792
    %vm799 = vweird.f32 %v793
    %vm800 = vmor %vm798, %vm799
    %v801 = vsel %vm800, %v793, %v797
    %v802 = vand.u32 2147483647, %v792
    %vm803 = vcmp.eq.f32.partialorder %v802, 8.507059e+37
    %v804 = vand.u32 %v792, 2147483648
    %v805 = vor.u32 1.1754944e-38, %v804
    %v806 = vsel %vm803, %v805, %v801
    %v807 = vmul.f32 1.0, %v806
    %v808 = vtanh.pop %v787
    %v809 = vmul.f32 %v807, %v658
    %811 = vrot.lane.b32.xlu0 %v808, 32
    %v812 = vpop.permute.xlu0 %811
    %v814 = vmul.f32 %v807, %v812
    %816 = vrot.lane.b32.xlu0 %v814, 32
    %v817 = vpop.permute.xlu0 %816
    %v819 = vadd.f32 %v809, %v817
    %v820 = vtanh.pop %v819
    %822 = vrot.lane.b32.xlu0 %v820, 32
    %v823 = vpop.permute.xlu0 %822
    %v825 = vmul.f32 %v807, %v823
    %827 = vrot.lane.b32.xlu0 %v825, 64
    %v828 = vpop.permute.xlu0 %827
    %830 = vrot.lane.b32.xlu0 %v732, 96
    %v831 = vpop.permute.xlu0 %830
    %v833 = vsel %vm113, %v828, %v831
    %v835 = vsel %vm118, %v833, 0
    %837 = vmatpush.msra.mxu0 0.0
    %838 = vmatpush.msra.mxu0 0.0
    %839 = vmatpush.msra.mxu0 0.0
    %840 = vmatpush.msra.mxu0 0.0
    %841 = vmatpush.msra.mxu0 0.0
    %842 = vmatpush.msra.mxu0 0.0
    %843 = vmatpush.msra.mxu0 0.0
    %844 = vmatpush.msra.mxu0 0.0
    %845 = vmatpush.msra.mxu0 %v105
    %846 = vmatpush.msra.mxu0 %v104
    %847 = vmatpush.msra.mxu0 %v103
    %848 = vmatpush.msra.mxu0 %v102
    %849 = vmatpush.msra.mxu0 %v101
    %850 = vmatpush.msra.mxu0 %v100
    %851 = vmatpush.msra.mxu0 %v99
    %852 = vmatpush.msra.mxu0 %v98
    %853 = vmatmul.f32.gmra.mxu0 %v835
    %v854 = vpop.f32.mrf.mxu0
    %v855 = vadd.f32 %v185, %v854
    %856 = vdwg.mxu0
    %v857 = vxor.u32 %v855, 2147483648
    %v858 = vmul.f32 %v857, 1.442695
    %v859 = vpow.pop %v858
    %v860 = vadd.f32 %v859, 1.0
    %v861 = vrcp.pop %v860
    %v862 = vmul.f32 %v860, %v861
    %v863 = vsub.f32 1.0, %v862
    %v864 = vmul.f32 %v861, %v863
    %v865 = vadd.f32 %v861, %v864
    %vm866 = vweird.f32 %v860
    %vm867 = vweird.f32 %v861
    %vm868 = vmor %vm866, %vm867
    %v869 = vsel %vm868, %v861, %v865
    %v870 = vand.u32 2147483647, %v860
    %vm871 = vcmp.eq.f32.partialorder %v870, 8.507059e+37
    %v872 = vand.u32 %v860, 2147483648
    %v873 = vor.u32 1.1754944e-38, %v872
    %v874 = vsel %vm871, %v873, %v869
    %v875 = vmul.f32 1.0, %v874
    %v876 = vtanh.pop %v855
    %v877 = vmul.f32 %v875, %v726
    %879 = vrot.lane.b32.xlu0 %v876, 32
    %v880 = vpop.permute.xlu0 %879
    %v882 = vmul.f32 %v875, %v880
    %884 = vrot.lane.b32.xlu0 %v882, 32
    %v885 = vpop.permute.xlu0 %884
    %v887 = vadd.f32 %v877, %v885
    %v888 = vtanh.pop %v887
    %890 = vrot.lane.b32.xlu0 %v888, 32
    %v891 = vpop.permute.xlu0 %890
    %v893 = vmul.f32 %v875, %v891
    %895 = vrot.lane.b32.xlu0 %v893, 64
    %v896 = vpop.permute.xlu0 %895
    %v897 = vsel %vm113, %v896, 0
    %899 = vmatpush.msra.mxu0 0.0
    %900 = vmatpush.msra.mxu0 0.0
    %901 = vmatpush.msra.mxu0 0.0
    %902 = vmatpush.msra.mxu0 0.0
    %903 = vmatpush.msra.mxu0 0.0
    %904 = vmatpush.msra.mxu0 0.0
    %905 = vmatpush.msra.mxu0 0.0
    %906 = vmatpush.msra.mxu0 0.0
    %907 = vmatpush.msra.mxu0 0.0
    %908 = vmatpush.msra.mxu0 0.0
    %909 = vmatpush.msra.mxu0 0.0
    %910 = vmatpush.msra.mxu0 0.0
    %911 = vmatpush.msra.mxu0 %v110
    %912 = vmatpush.msra.mxu0 %v109
    %913 = vmatpush.msra.mxu0 %v108
    %914 = vmatpush.msra.mxu0 %v107
    %915 = vmatmul.f32.gmra.mxu0 %v897
    %v916 = vpop.f32.mrf.mxu0
    %v917 = vadd.f32 %v248, %v916
    %918 = vdwg.mxu0
    %s919 = scalar_lea.vmem %s7, 8
    %920 = vst.msk [vmem:[%s919] sm:$0x3] %vm275, %v917
    %s921 = scalar_lea.vmem [#allocation2], 10
    %v922 = vld [vmem:[%s921] sm:$0x3]
    %923 = vrot.lane.b32.xlu0 %v825, 96
    %v924 = vpop.permute.xlu0 %923
    %v926 = vsel %vm113, %v922, %v924
    %v928 = vsel %vm118, %v926, 0
    %930 = vmatpush.msra.mxu0 0.0
    %931 = vmatpush.msra.mxu0 0.0
    %932 = vmatpush.msra.mxu0 0.0
    %933 = vmatpush.msra.mxu0 0.0
    %934 = vmatpush.msra.mxu0 0.0
    %935 = vmatpush.msra.mxu0 0.0
    %936 = vmatpush.msra.mxu0 0.0
    %937 = vmatpush.msra.mxu0 0.0
    %938 = vmatpush.msra.mxu0 %v96
    %939 = vmatpush.msra.mxu0 %v95
    %940 = vmatpush.msra.mxu0 %v94
    %941 = vmatpush.msra.mxu0 %v93
    %942 = vmatpush.msra.mxu0 %v92
    %943 = vmatpush.msra.mxu0 %v91
    %944 = vmatpush.msra.mxu0 %v90
    %945 = vmatpush.msra.mxu0 %v89
    %946 = vmatmul.f32.gmra.mxu0 %v928
    %v947 = vpop.f32.mrf.mxu0
    %v948 = vadd.f32 %v116, %v947
    %949 = vdwg.mxu0
    %v950 = vxor.u32 %v948, 2147483648
    %v951 = vmul.f32 %v950, 1.442695
    %v952 = vpow.pop %v951
    %v953 = vadd.f32 %v952, 1.0
    %v954 = vrcp.pop %v953
    %v955 = vmul.f32 %v953, %v954
    %v956 = vsub.f32 1.0, %v955
    %v957 = vmul.f32 %v954, %v956
    %v958 = vadd.f32 %v954, %v957
    %vm959 = vweird.f32 %v953
    %vm960 = vweird.f32 %v954
    %vm961 = vmor %vm959, %vm960
    %v962 = vsel %vm961, %v954, %v958
    %v963 = vand.u32 2147483647, %v953
    %vm964 = vcmp.eq.f32.partialorder %v963, 8.507059e+37
    %v965 = vand.u32 %v953, 2147483648
    %v966 = vor.u32 1.1754944e-38, %v965
    %v967 = vsel %vm964, %v966, %v962
    %v968 = vmul.f32 1.0, %v967
    %v969 = vtanh.pop %v948
    %v970 = vmul.f32 %v968, %v819
    %972 = vrot.lane.b32.xlu0 %v969, 32
    %v973 = vpop.permute.xlu0 %972
    %v975 = vmul.f32 %v968, %v973
    %977 = vrot.lane.b32.xlu0 %v975, 32
    %v978 = vpop.permute.xlu0 %977
    %v980 = vadd.f32 %v970, %v978
    %v981 = vtanh.pop %v980
    %983 = vrot.lane.b32.xlu0 %v981, 32
    %v984 = vpop.permute.xlu0 %983
    %v986 = vmul.f32 %v968, %v984
    %988 = vrot.lane.b32.xlu0 %v986, 64
    %v989 = vpop.permute.xlu0 %988
    %991 = vrot.lane.b32.xlu0 %v893, 96
    %v992 = vpop.permute.xlu0 %991
    %v994 = vsel %vm113, %v989, %v992
    %v996 = vsel %vm118, %v994, 0
    %998 = vmatpush.msra.mxu0 0.0
    %999 = vmatpush.msra.mxu0 0.0
    %1000 = vmatpush.msra.mxu0 0.0
    %1001 = vmatpush.msra.mxu0 0.0
    %1002 = vmatpush.msra.mxu0 0.0
    %1003 = vmatpush.msra.mxu0 0.0
    %1004 = vmatpush.msra.mxu0 0.0
    %1005 = vmatpush.msra.mxu0 0.0
    %1006 = vmatpush.msra.mxu0 %v105
    %1007 = vmatpush.msra.mxu0 %v104
    %1008 = vmatpush.msra.mxu0 %v103
    %1009 = vmatpush.msra.mxu0 %v102
    %1010 = vmatpush.msra.mxu0 %v101
    %1011 = vmatpush.msra.mxu0 %v100
    %1012 = vmatpush.msra.mxu0 %v99
    %1013 = vmatpush.msra.mxu0 %v98
    %1014 = vmatmul.f32.gmra.mxu0 %v996
    %v1015 = vpop.f32.mrf.mxu0
    %v1016 = vadd.f32 %v185, %v1015
    %1017 = vdwg.mxu0
    %v1018 = vxor.u32 %v1016, 2147483648
    %v1019 = vmul.f32 %v1018, 1.442695
    %v1020 = vpow.pop %v1019
    %v1021 = vadd.f32 %v1020, 1.0
    %v1022 = vrcp.pop %v1021
    %v1023 = vmul.f32 %v1021, %v1022
    %v1024 = vsub.f32 1.0, %v1023
    %v1025 = vmul.f32 %v1022, %v1024
    %v1026 = vadd.f32 %v1022, %v1025
    %vm1027 = vweird.f32 %v1021
    %vm1028 = vweird.f32 %v1022
    %vm1029 = vmor %vm1027, %vm1028
    %v1030 = vsel %vm1029, %v1022, %v1026
    %v1031 = vand.u32 2147483647, %v1021
    %vm1032 = vcmp.eq.f32.partialorder %v1031, 8.507059e+37
    %v1033 = vand.u32 %v1021, 2147483648
    %v1034 = vor.u32 1.1754944e-38, %v1033
    %v1035 = vsel %vm1032, %v1034, %v1030
    %v1036 = vmul.f32 1.0, %v1035
    %v1037 = vtanh.pop %v1016
    %v1038 = vmul.f32 %v1036, %v887
    %1040 = vrot.lane.b32.xlu0 %v1037, 32
    %v1041 = vpop.permute.xlu0 %1040
    %v1043 = vmul.f32 %v1036, %v1041
    %1045 = vrot.lane.b32.xlu0 %v1043, 32
    %v1046 = vpop.permute.xlu0 %1045
    %v1048 = vadd.f32 %v1038, %v1046
    %v1049 = vtanh.pop %v1048
    %1051 = vrot.lane.b32.xlu0 %v1049, 32
    %v1052 = vpop.permute.xlu0 %1051
    %v1054 = vmul.f32 %v1036, %v1052
    %1056 = vrot.lane.b32.xlu0 %v1054, 64
    %v1057 = vpop.permute.xlu0 %1056
    %v1058 = vsel %vm113, %v1057, 0
    %1060 = vmatpush.msra.mxu0 0.0
    %1061 = vmatpush.msra.mxu0 0.0
    %1062 = vmatpush.msra.mxu0 0.0
    %1063 = vmatpush.msra.mxu0 0.0
    %1064 = vmatpush.msra.mxu0 0.0
    %1065 = vmatpush.msra.mxu0 0.0
    %1066 = vmatpush.msra.mxu0 0.0
    %1067 = vmatpush.msra.mxu0 0.0
    %1068 = vmatpush.msra.mxu0 0.0
    %1069 = vmatpush.msra.mxu0 0.0
    %1070 = vmatpush.msra.mxu0 0.0
    %1071 = vmatpush.msra.mxu0 0.0
    %1072 = vmatpush.msra.mxu0 %v110
    %1073 = vmatpush.msra.mxu0 %v109
    %1074 = vmatpush.msra.mxu0 %v108
    %1075 = vmatpush.msra.mxu0 %v107
    %1076 = vmatmul.f32.gmra.mxu0 %v1058
    %v1077 = vpop.f32.mrf.mxu0
    %v1078 = vadd.f32 %v248, %v1077
    %1079 = vdwg.mxu0
    %s1080 = scalar_lea.vmem %s7, 10
    %1081 = vst.msk [vmem:[%s1080] sm:$0x3] %vm275, %v1078
    %s1082 = scalar_lea.vmem [#allocation2], 12
    %v1083 = vld [vmem:[%s1082] sm:$0x3]
    %1084 = vrot.lane.b32.xlu0 %v986, 96
    %v1085 = vpop.permute.xlu0 %1084
    %v1087 = vsel %vm113, %v1083, %v1085
    %v1089 = vsel %vm118, %v1087, 0
    %1091 = vmatpush.msra.mxu0 0.0
    %1092 = vmatpush.msra.mxu0 0.0
    %1093 = vmatpush.msra.mxu0 0.0
    %1094 = vmatpush.msra.mxu0 0.0
    %1095 = vmatpush.msra.mxu0 0.0
    %1096 = vmatpush.msra.mxu0 0.0
    %1097 = vmatpush.msra.mxu0 0.0
    %1098 = vmatpush.msra.mxu0 0.0
    %1099 = vmatpush.msra.mxu0 %v96
    %1100 = vmatpush.msra.mxu0 %v95
    %1101 = vmatpush.msra.mxu0 %v94
    %1102 = vmatpush.msra.mxu0 %v93
    %1103 = vmatpush.msra.mxu0 %v92
    %1104 = vmatpush.msra.mxu0 %v91
    %1105 = vmatpush.msra.mxu0 %v90
    %1106 = vmatpush.msra.mxu0 %v89
    %1107 = vmatmul.f32.gmra.mxu0 %v1089
    %v1108 = vpop.f32.mrf.mxu0
    %v1109 = vadd.f32 %v116, %v1108
    %1110 = vdwg.mxu0
    %v1111 = vxor.u32 %v1109, 2147483648
    %v1112 = vmul.f32 %v1111, 1.442695
    %v1113 = vpow.pop %v1112
    %v1114 = vadd.f32 %v1113, 1.0
    %v1115 = vrcp.pop %v1114
    %v1116 = vmul.f32 %v1114, %v1115
    %v1117 = vsub.f32 1.0, %v1116
    %v1118 = vmul.f32 %v1115, %v1117
    %v1119 = vadd.f32 %v1115, %v1118
    %vm1120 = vweird.f32 %v1114
    %vm1121 = vweird.f32 %v1115
    %vm1122 = vmor %vm1120, %vm1121
    %v1123 = vsel %vm1122, %v1115, %v1119
    %v1124 = vand.u32 2147483647, %v1114
    %vm1125 = vcmp.eq.f32.partialorder %v1124, 8.507059e+37
    %v1126 = vand.u32 %v1114, 2147483648
    %v1127 = vor.u32 1.1754944e-38, %v1126
    %v1128 = vsel %vm1125, %v1127, %v1123
    %v1129 = vmul.f32 1.0, %v1128
    %v1130 = vtanh.pop %v1109
    %v1131 = vmul.f32 %v1129, %v980
    %1133 = vrot.lane.b32.xlu0 %v1130, 32
    %v1134 = vpop.permute.xlu0 %1133
    %v1136 = vmul.f32 %v1129, %v1134
    %1138 = vrot.lane.b32.xlu0 %v1136, 32
    %v1139 = vpop.permute.xlu0 %1138
    %v1141 = vadd.f32 %v1131, %v1139
    %v1142 = vtanh.pop %v1141
    %1144 = vrot.lane.b32.xlu0 %v1142, 32
    %v1145 = vpop.permute.xlu0 %1144
    %v1147 = vmul.f32 %v1129, %v1145
    %1149 = vrot.lane.b32.xlu0 %v1147, 64
    %v1150 = vpop.permute.xlu0 %1149
    %1152 = vrot.lane.b32.xlu0 %v1054, 96
    %v1153 = vpop.permute.xlu0 %1152
    %v1155 = vsel %vm113, %v1150, %v1153
    %v1157 = vsel %vm118, %v1155, 0
    %1159 = vmatpush.msra.mxu0 0.0
    %1160 = vmatpush.msra.mxu0 0.0
    %1161 = vmatpush.msra.mxu0 0.0
    %1162 = vmatpush.msra.mxu0 0.0
    %1163 = vmatpush.msra.mxu0 0.0
    %1164 = vmatpush.msra.mxu0 0.0
    %1165 = vmatpush.msra.mxu0 0.0
    %1166 = vmatpush.msra.mxu0 0.0
    %1167 = vmatpush.msra.mxu0 %v105
    %1168 = vmatpush.msra.mxu0 %v104
    %1169 = vmatpush.msra.mxu0 %v103
    %1170 = vmatpush.msra.mxu0 %v102
    %1171 = vmatpush.msra.mxu0 %v101
    %1172 = vmatpush.msra.mxu0 %v100
    %1173 = vmatpush.msra.mxu0 %v99
    %1174 = vmatpush.msra.mxu0 %v98
    %1175 = vmatmul.f32.gmra.mxu0 %v1157
    %v1176 = vpop.f32.mrf.mxu0
    %v1177 = vadd.f32 %v185, %v1176
    %1178 = vdwg.mxu0
    %v1179 = vxor.u32 %v1177, 2147483648
    %v1180 = vmul.f32 %v1179, 1.442695
    %v1181 = vpow.pop %v1180
    %v1182 = vadd.f32 %v1181, 1.0
    %v1183 = vrcp.pop %v1182
    %v1184 = vmul.f32 %v1182, %v1183
    %v1185 = vsub.f32 1.0, %v1184
    %v1186 = vmul.f32 %v1183, %v1185
    %v1187 = vadd.f32 %v1183, %v1186
    %vm1188 = vweird.f32 %v1182
    %vm1189 = vweird.f32 %v1183
    %vm1190 = vmor %vm1188, %vm1189
    %v1191 = vsel %vm1190, %v1183, %v1187
    %v1192 = vand.u32 2147483647, %v1182
    %vm1193 = vcmp.eq.f32.partialorder %v1192, 8.507059e+37
    %v1194 = vand.u32 %v1182, 2147483648
    %v1195 = vor.u32 1.1754944e-38, %v1194
    %v1196 = vsel %vm1193, %v1195, %v1191
    %v1197 = vmul.f32 1.0, %v1196
    %v1198 = vtanh.pop %v1177
    %v1199 = vmul.f32 %v1197, %v1048
    %1201 = vrot.lane.b32.xlu0 %v1198, 32
    %v1202 = vpop.permute.xlu0 %1201
    %v1204 = vmul.f32 %v1197, %v1202
    %1206 = vrot.lane.b32.xlu0 %v1204, 32
    %v1207 = vpop.permute.xlu0 %1206
    %v1209 = vadd.f32 %v1199, %v1207
    %v1210 = vtanh.pop %v1209
    %1212 = vrot.lane.b32.xlu0 %v1210, 32
    %v1213 = vpop.permute.xlu0 %1212
    %v1215 = vmul.f32 %v1197, %v1213
    %1217 = vrot.lane.b32.xlu0 %v1215, 64
    %v1218 = vpop.permute.xlu0 %1217
    %v1219 = vsel %vm113, %v1218, 0
    %1221 = vmatpush.msra.mxu0 0.0
    %1222 = vmatpush.msra.mxu0 0.0
    %1223 = vmatpush.msra.mxu0 0.0
    %1224 = vmatpush.msra.mxu0 0.0
    %1225 = vmatpush.msra.mxu0 0.0
    %1226 = vmatpush.msra.mxu0 0.0
    %1227 = vmatpush.msra.mxu0 0.0
    %1228 = vmatpush.msra.mxu0 0.0
    %1229 = vmatpush.msra.mxu0 0.0
    %1230 = vmatpush.msra.mxu0 0.0
    %1231 = vmatpush.msra.mxu0 0.0
    %1232 = vmatpush.msra.mxu0 0.0
    %1233 = vmatpush.msra.mxu0 %v110
    %1234 = vmatpush.msra.mxu0 %v109
    %1235 = vmatpush.msra.mxu0 %v108
    %1236 = vmatpush.msra.mxu0 %v107
    %1237 = vmatmul.f32.gmra.mxu0 %v1219
    %v1238 = vpop.f32.mrf.mxu0
    %v1239 = vadd.f32 %v248, %v1238
    %1240 = vdwg.mxu0
    %s1241 = scalar_lea.vmem %s7, 12
    %1242 = vst.msk [vmem:[%s1241] sm:$0x3] %vm275, %v1239
    %s1243 = scalar_lea.vmem [#allocation2], 14
    %v1244 = vld [vmem:[%s1243] sm:$0x3]
    %1245 = vrot.lane.b32.xlu0 %v1147, 96
    %v1246 = vpop.permute.xlu0 %1245
    %v1248 = vsel %vm113, %v1244, %v1246
    %v1250 = vsel %vm118, %v1248, 0
    %1252 = vmatpush.msra.mxu0 0.0
    %1253 = vmatpush.msra.mxu0 0.0
    %1254 = vmatpush.msra.mxu0 0.0
    %1255 = vmatpush.msra.mxu0 0.0
    %1256 = vmatpush.msra.mxu0 0.0
    %1257 = vmatpush.msra.mxu0 0.0
    %1258 = vmatpush.msra.mxu0 0.0
    %1259 = vmatpush.msra.mxu0 0.0
    %1260 = vmatpush.msra.mxu0 %v96
    %1261 = vmatpush.msra.mxu0 %v95
    %1262 = vmatpush.msra.mxu0 %v94
    %1263 = vmatpush.msra.mxu0 %v93
    %1264 = vmatpush.msra.mxu0 %v92
    %1265 = vmatpush.msra.mxu0 %v91
    %1266 = vmatpush.msra.mxu0 %v90
    %1267 = vmatpush.msra.mxu0 %v89
    %1268 = vmatmul.f32.gmra.mxu0 %v1250
    %v1269 = vpop.f32.mrf.mxu0
    %v1270 = vadd.f32 %v116, %v1269
    %1271 = vdwg.mxu0
    %v1272 = vxor.u32 %v1270, 2147483648
    %v1273 = vmul.f32 %v1272, 1.442695
    %v1274 = vpow.pop %v1273
    %v1275 = vadd.f32 %v1274, 1.0
    %v1276 = vrcp.pop %v1275
    %v1277 = vmul.f32 %v1275, %v1276
    %v1278 = vsub.f32 1.0, %v1277
    %v1279 = vmul.f32 %v1276, %v1278
    %v1280 = vadd.f32 %v1276, %v1279
    %vm1281 = vweird.f32 %v1275
    %vm1282 = vweird.f32 %v1276
    %vm1283 = vmor %vm1281, %vm1282
    %v1284 = vsel %vm1283, %v1276, %v1280
    %v1285 = vand.u32 2147483647, %v1275
    %vm1286 = vcmp.eq.f32.partialorder %v1285, 8.507059e+37
    %v1287 = vand.u32 %v1275, 2147483648
    %v1288 = vor.u32 1.1754944e-38, %v1287
    %v1289 = vsel %vm1286, %v1288, %v1284
    %v1290 = vmul.f32 1.0, %v1289
    %v1291 = vtanh.pop %v1270
    %v1292 = vmul.f32 %v1290, %v1141
    %1294 = vrot.lane.b32.xlu0 %v1291, 32
    %v1295 = vpop.permute.xlu0 %1294
    %v1297 = vmul.f32 %v1290, %v1295
    %1299 = vrot.lane.b32.xlu0 %v1297, 32
    %v1300 = vpop.permute.xlu0 %1299
    %v1302 = vadd.f32 %v1292, %v1300
    %v1303 = vtanh.pop %v1302
    %1305 = vrot.lane.b32.xlu0 %v1303, 32
    %v1306 = vpop.permute.xlu0 %1305
    %v1308 = vmul.f32 %v1290, %v1306
    %1310 = vrot.lane.b32.xlu0 %v1308, 64
    %v1311 = vpop.permute.xlu0 %1310
    %1313 = vrot.lane.b32.xlu0 %v1215, 96
    %v1314 = vpop.permute.xlu0 %1313
    %v1316 = vsel %vm113, %v1311, %v1314
    %v1318 = vsel %vm118, %v1316, 0
    %1320 = vmatpush.msra.mxu0 0.0
    %1321 = vmatpush.msra.mxu0 0.0
    %1322 = vmatpush.msra.mxu0 0.0
    %1323 = vmatpush.msra.mxu0 0.0
    %1324 = vmatpush.msra.mxu0 0.0
    %1325 = vmatpush.msra.mxu0 0.0
    %1326 = vmatpush.msra.mxu0 0.0
    %1327 = vmatpush.msra.mxu0 0.0
    %1328 = vmatpush.msra.mxu0 %v105
    %1329 = vmatpush.msra.mxu0 %v104
    %1330 = vmatpush.msra.mxu0 %v103
    %1331 = vmatpush.msra.mxu0 %v102
    %1332 = vmatpush.msra.mxu0 %v101
    %1333 = vmatpush.msra.mxu0 %v100
    %1334 = vmatpush.msra.mxu0 %v99
    %1335 = vmatpush.msra.mxu0 %v98
    %1336 = vmatmul.f32.gmra.mxu0 %v1318
    %v1337 = vpop.f32.mrf.mxu0
    %v1338 = vadd.f32 %v185, %v1337
    %1339 = vdwg.mxu0
    %v1340 = vxor.u32 %v1338, 2147483648
    %v1341 = vmul.f32 %v1340, 1.442695
    %v1342 = vpow.pop %v1341
    %v1343 = vadd.f32 %v1342, 1.0
    %v1344 = vrcp.pop %v1343
    %v1345 = vmul.f32 %v1343, %v1344
    %v1346 = vsub.f32 1.0, %v1345
    %v1347 = vmul.f32 %v1344, %v1346
    %v1348 = vadd.f32 %v1344, %v1347
    %vm1349 = vweird.f32 %v1343
    %vm1350 = vweird.f32 %v1344
    %vm1351 = vmor %vm1349, %vm1350
    %v1352 = vsel %vm1351, %v1344, %v1348
    %v1353 = vand.u32 2147483647, %v1343
    %vm1354 = vcmp.eq.f32.partialorder %v1353, 8.507059e+37
    %v1355 = vand.u32 %v1343, 2147483648
    %v1356 = vor.u32 1.1754944e-38, %v1355
    %v1357 = vsel %vm1354, %v1356, %v1352
    %v1358 = vmul.f32 1.0, %v1357
    %v1359 = vtanh.pop %v1338
    %v1360 = vmul.f32 %v1358, %v1209
    %1362 = vrot.lane.b32.xlu0 %v1359, 32
    %v1363 = vpop.permute.xlu0 %1362
    %v1365 = vmul.f32 %v1358, %v1363
    %1367 = vrot.lane.b32.xlu0 %v1365, 32
    %v1368 = vpop.permute.xlu0 %1367
    %v1370 = vadd.f32 %v1360, %v1368
    %v1371 = vtanh.pop %v1370
    %1373 = vrot.lane.b32.xlu0 %v1371, 32
    %v1374 = vpop.permute.xlu0 %1373
    %v1376 = vmul.f32 %v1358, %v1374
    %1378 = vrot.lane.b32.xlu0 %v1376, 64
    %v1379 = vpop.permute.xlu0 %1378
    %v1380 = vsel %vm113, %v1379, 0
    %1382 = vmatpush.msra.mxu0 0.0
    %1383 = vmatpush.msra.mxu0 0.0
    %1384 = vmatpush.msra.mxu0 0.0
    %1385 = vmatpush.msra.mxu0 0.0
    %1386 = vmatpush.msra.mxu0 0.0
    %1387 = vmatpush.msra.mxu0 0.0
    %1388 = vmatpush.msra.mxu0 0.0
    %1389 = vmatpush.msra.mxu0 0.0
    %1390 = vmatpush.msra.mxu0 0.0
    %1391 = vmatpush.msra.mxu0 0.0
    %1392 = vmatpush.msra.mxu0 0.0
    %1393 = vmatpush.msra.mxu0 0.0
    %1394 = vmatpush.msra.mxu0 %v110
    %1395 = vmatpush.msra.mxu0 %v109
    %1396 = vmatpush.msra.mxu0 %v108
    %1397 = vmatpush.msra.mxu0 %v107
    %1398 = vmatmul.f32.gmra.mxu0 %v1380
    %v1399 = vpop.f32.mrf.mxu0
    %v1400 = vadd.f32 %v248, %v1399
    %1401 = vdwg.mxu0
    %s1402 = scalar_lea.vmem %s7, 14
    %1403 = vst.msk [vmem:[%s1402] sm:$0x3] %vm275, %v1400
    %1404 = vrot.lane.b32.xlu0 %v1308, 96
    %v1405 = vpop.permute.xlu0 %1404
    %v1407 = vsel %vm113, %v1400, %v1405
    %v1409 = vsel %vm118, %v1407, 0
    %1411 = vmatpush.msra.mxu0 0.0
    %1412 = vmatpush.msra.mxu0 0.0
    %1413 = vmatpush.msra.mxu0 0.0
    %1414 = vmatpush.msra.mxu0 0.0
    %1415 = vmatpush.msra.mxu0 0.0
    %1416 = vmatpush.msra.mxu0 0.0
    %1417 = vmatpush.msra.mxu0 0.0
    %1418 = vmatpush.msra.mxu0 0.0
    %1419 = vmatpush.msra.mxu0 %v96
    %1420 = vmatpush.msra.mxu0 %v95
    %1421 = vmatpush.msra.mxu0 %v94
    %1422 = vmatpush.msra.mxu0 %v93
    %1423 = vmatpush.msra.mxu0 %v92
    %1424 = vmatpush.msra.mxu0 %v91
    %1425 = vmatpush.msra.mxu0 %v90
    %1426 = vmatpush.msra.mxu0 %v89
    %1427 = vmatmul.f32.gmra.mxu0 %v1409
    %v1428 = vpop.f32.mrf.mxu0
    %v1429 = vadd.f32 %v116, %v1428
    %1430 = vdwg.mxu0
    %v1431 = vxor.u32 %v1429, 2147483648
    %v1432 = vmul.f32 %v1431, 1.442695
    %v1433 = vpow.pop %v1432
    %v1434 = vadd.f32 %v1433, 1.0
    %v1435 = vrcp.pop %v1434
    %v1436 = vmul.f32 %v1434, %v1435
    %v1437 = vsub.f32 1.0, %v1436
    %v1438 = vmul.f32 %v1435, %v1437
    %v1439 = vadd.f32 %v1435, %v1438
    %vm1440 = vweird.f32 %v1434
    %vm1441 = vweird.f32 %v1435
    %vm1442 = vmor %vm1440, %vm1441
    %v1443 = vsel %vm1442, %v1435, %v1439
    %v1444 = vand.u32 2147483647, %v1434
    %vm1445 = vcmp.eq.f32.partialorder %v1444, 8.507059e+37
    %v1446 = vand.u32 %v1434, 2147483648
    %v1447 = vor.u32 1.1754944e-38, %v1446
    %v1448 = vsel %vm1445, %v1447, %v1443
    %v1449 = vmul.f32 1.0, %v1448
    %v1450 = vtanh.pop %v1429
    %v1451 = vmul.f32 %v1449, %v1302
    %1453 = vrot.lane.b32.xlu0 %v1450, 32
    %v1454 = vpop.permute.xlu0 %1453
    %v1456 = vmul.f32 %v1449, %v1454
    %1458 = vrot.lane.b32.xlu0 %v1456, 32
    %v1459 = vpop.permute.xlu0 %1458
    %v1461 = vadd.f32 %v1451, %v1459
    %v1462 = vtanh.pop %v1461
    %1464 = vrot.lane.b32.xlu0 %v1462, 32
    %v1465 = vpop.permute.xlu0 %1464
    %v1467 = vmul.f32 %v1449, %v1465
    %1469 = vrot.lane.b32.xlu0 %v1467, 64
    %v1470 = vpop.permute.xlu0 %1469
    %1472 = vrot.lane.b32.xlu0 %v1376, 96
    %v1473 = vpop.permute.xlu0 %1472
    %v1475 = vsel %vm113, %v1470, %v1473
    %v1477 = vsel %vm118, %v1475, 0
    %1479 = vmatpush.msra.mxu0 0.0
    %1480 = vmatpush.msra.mxu0 0.0
    %1481 = vmatpush.msra.mxu0 0.0
    %1482 = vmatpush.msra.mxu0 0.0
    %1483 = vmatpush.msra.mxu0 0.0
    %1484 = vmatpush.msra.mxu0 0.0
    %1485 = vmatpush.msra.mxu0 0.0
    %1486 = vmatpush.msra.mxu0 0.0
    %1487 = vmatpush.msra.mxu0 %v105
    %1488 = vmatpush.msra.mxu0 %v104
    %1489 = vmatpush.msra.mxu0 %v103
    %1490 = vmatpush.msra.mxu0 %v102
    %1491 = vmatpush.msra.mxu0 %v101
    %1492 = vmatpush.msra.mxu0 %v100
    %1493 = vmatpush.msra.mxu0 %v99
    %1494 = vmatpush.msra.mxu0 %v98
    %1495 = vmatmul.f32.gmra.mxu0 %v1477
    %v1496 = vpop.f32.mrf.mxu0
    %v1497 = vadd.f32 %v185, %v1496
    %1498 = vdwg.mxu0
    %v1499 = vxor.u32 %v1497, 2147483648
    %v1500 = vmul.f32 %v1499, 1.442695
    %v1501 = vpow.pop %v1500
    %v1502 = vadd.f32 %v1501, 1.0
    %v1503 = vrcp.pop %v1502
    %v1504 = vmul.f32 %v1502, %v1503
    %v1505 = vsub.f32 1.0, %v1504
    %v1506 = vmul.f32 %v1503, %v1505
    %v1507 = vadd.f32 %v1503, %v1506
    %vm1508 = vweird.f32 %v1502
    %vm1509 = vweird.f32 %v1503
    %vm1510 = vmor %vm1508, %vm1509
    %v1511 = vsel %vm1510, %v1503, %v1507
    %v1512 = vand.u32 2147483647, %v1502
    %vm1513 = vcmp.eq.f32.partialorder %v1512, 8.507059e+37
    %v1514 = vand.u32 %v1502, 2147483648
    %v1515 = vor.u32 1.1754944e-38, %v1514
    %v1516 = vsel %vm1513, %v1515, %v1511
    %v1517 = vmul.f32 1.0, %v1516
    %v1518 = vtanh.pop %v1497
    %v1519 = vmul.f32 %v1517, %v1370
    %1521 = vrot.lane.b32.xlu0 %v1518, 32
    %v1522 = vpop.permute.xlu0 %1521
    %v1524 = vmul.f32 %v1517, %v1522
    %1526 = vrot.lane.b32.xlu0 %v1524, 32
    %v1527 = vpop.permute.xlu0 %1526
    %v1529 = vadd.f32 %v1519, %v1527
    %v1530 = vtanh.pop %v1529
    %1532 = vrot.lane.b32.xlu0 %v1530, 32
    %v1533 = vpop.permute.xlu0 %1532
    %v1535 = vmul.f32 %v1517, %v1533
    %1537 = vrot.lane.b32.xlu0 %v1535, 64
    %v1538 = vpop.permute.xlu0 %1537
    %v1539 = vsel %vm113, %v1538, 0
    %1541 = vmatpush.msra.mxu0 0.0
    %1542 = vmatpush.msra.mxu0 0.0
    %1543 = vmatpush.msra.mxu0 0.0
    %1544 = vmatpush.msra.mxu0 0.0
    %1545 = vmatpush.msra.mxu0 0.0
    %1546 = vmatpush.msra.mxu0 0.0
    %1547 = vmatpush.msra.mxu0 0.0
    %1548 = vmatpush.msra.mxu0 0.0
    %1549 = vmatpush.msra.mxu0 0.0
    %1550 = vmatpush.msra.mxu0 0.0
    %1551 = vmatpush.msra.mxu0 0.0
    %1552 = vmatpush.msra.mxu0 0.0
    %1553 = vmatpush.msra.mxu0 %v110
    %1554 = vmatpush.msra.mxu0 %v109
    %1555 = vmatpush.msra.mxu0 %v108
    %1556 = vmatpush.msra.mxu0 %v107
    %1557 = vmatmul.f32.gmra.mxu0 %v1539
    %v1558 = vpop.f32.mrf.mxu0
    %v1559 = vadd.f32 %v248, %v1558
    %1560 = vdwg.mxu0
    %s1561 = scalar_lea.vmem %s7, 16
    %1562 = vst.msk [vmem:[%s1561] sm:$0x3] %vm275, %v1559
    %1563 = vrot.lane.b32.xlu0 %v1467, 96
    %v1564 = vpop.permute.xlu0 %1563
    %v1566 = vsel %vm113, %v1559, %v1564
    %v1568 = vsel %vm118, %v1566, 0
    %1570 = vmatpush.msra.mxu0 0.0
    %1571 = vmatpush.msra.mxu0 0.0
    %1572 = vmatpush.msra.mxu0 0.0
    %1573 = vmatpush.msra.mxu0 0.0
    %1574 = vmatpush.msra.mxu0 0.0
    %1575 = vmatpush.msra.mxu0 0.0
    %1576 = vmatpush.msra.mxu0 0.0
    %1577 = vmatpush.msra.mxu0 0.0
    %1578 = vmatpush.msra.mxu0 %v96
    %1579 = vmatpush.msra.mxu0 %v95
    %1580 = vmatpush.msra.mxu0 %v94
    %1581 = vmatpush.msra.mxu0 %v93
    %1582 = vmatpush.msra.mxu0 %v92
    %1583 = vmatpush.msra.mxu0 %v91
    %1584 = vmatpush.msra.mxu0 %v90
    %1585 = vmatpush.msra.mxu0 %v89
    %1586 = vmatmul.f32.gmra.mxu0 %v1568
    %v1587 = vpop.f32.mrf.mxu0
    %v1588 = vadd.f32 %v116, %v1587
    %1589 = vdwg.mxu0
    %v1590 = vxor.u32 %v1588, 2147483648
    %v1591 = vmul.f32 %v1590, 1.442695
    %v1592 = vpow.pop %v1591
    %v1593 = vadd.f32 %v1592, 1.0
    %v1594 = vrcp.pop %v1593
    %v1595 = vmul.f32 %v1593, %v1594
    %v1596 = vsub.f32 1.0, %v1595
    %v1597 = vmul.f32 %v1594, %v1596
    %v1598 = vadd.f32 %v1594, %v1597
    %vm1599 = vweird.f32 %v1593
    %vm1600 = vweird.f32 %v1594
    %vm1601 = vmor %vm1599, %vm1600
    %v1602 = vsel %vm1601, %v1594, %v1598
    %v1603 = vand.u32 2147483647, %v1593
    %vm1604 = vcmp.eq.f32.partialorder %v1603, 8.507059e+37
    %v1605 = vand.u32 %v1593, 2147483648
    %v1606 = vor.u32 1.1754944e-38, %v1605
    %v1607 = vsel %vm1604, %v1606, %v1602
    %v1608 = vmul.f32 1.0, %v1607
    %v1609 = vtanh.pop %v1588
    %v1610 = vmul.f32 %v1608, %v1461
    %1612 = vrot.lane.b32.xlu0 %v1609, 32
    %v1613 = vpop.permute.xlu0 %1612
    %v1615 = vmul.f32 %v1608, %v1613
    %1617 = vrot.lane.b32.xlu0 %v1615, 32
    %v1618 = vpop.permute.xlu0 %1617
    %v1620 = vadd.f32 %v1610, %v1618
    %v1621 = vtanh.pop %v1620
    %1623 = vrot.lane.b32.xlu0 %v1621, 32
    %v1624 = vpop.permute.xlu0 %1623
    %v1626 = vmul.f32 %v1608, %v1624
    %1628 = vrot.lane.b32.xlu0 %v1626, 64
    %v1629 = vpop.permute.xlu0 %1628
    %1631 = vrot.lane.b32.xlu0 %v1535, 96
    %v1632 = vpop.permute.xlu0 %1631
    %v1634 = vsel %vm113, %v1629, %v1632
    %v1636 = vsel %vm118, %v1634, 0
    %1638 = vmatpush.msra.mxu0 0.0
    %1639 = vmatpush.msra.mxu0 0.0
    %1640 = vmatpush.msra.mxu0 0.0
    %1641 = vmatpush.msra.mxu0 0.0
    %1642 = vmatpush.msra.mxu0 0.0
    %1643 = vmatpush.msra.mxu0 0.0
    %1644 = vmatpush.msra.mxu0 0.0
    %1645 = vmatpush.msra.mxu0 0.0
    %1646 = vmatpush.msra.mxu0 %v105
    %1647 = vmatpush.msra.mxu0 %v104
    %1648 = vmatpush.msra.mxu0 %v103
    %1649 = vmatpush.msra.mxu0 %v102
    %1650 = vmatpush.msra.mxu0 %v101
    %1651 = vmatpush.msra.mxu0 %v100
    %1652 = vmatpush.msra.mxu0 %v99
    %1653 = vmatpush.msra.mxu0 %v98
    %1654 = vmatmul.f32.gmra.mxu0 %v1636
    %v1655 = vpop.f32.mrf.mxu0
    %v1656 = vadd.f32 %v185, %v1655
    %1657 = vdwg.mxu0
    %v1658 = vxor.u32 %v1656, 2147483648
    %v1659 = vmul.f32 %v1658, 1.442695
    %v1660 = vpow.pop %v1659
    %v1661 = vadd.f32 %v1660, 1.0
    %v1662 = vrcp.pop %v1661
    %v1663 = vmul.f32 %v1661, %v1662
    %v1664 = vsub.f32 1.0, %v1663
    %v1665 = vmul.f32 %v1662, %v1664
    %v1666 = vadd.f32 %v1662, %v1665
    %vm1667 = vweird.f32 %v1661
    %vm1668 = vweird.f32 %v1662
    %vm1669 = vmor %vm1667, %vm1668
    %v1670 = vsel %vm1669, %v1662, %v1666
    %v1671 = vand.u32 2147483647, %v1661
    %vm1672 = vcmp.eq.f32.partialorder %v1671, 8.507059e+37
    %v1673 = vand.u32 %v1661, 2147483648
    %v1674 = vor.u32 1.1754944e-38, %v1673
    %v1675 = vsel %vm1672, %v1674, %v1670
    %v1676 = vmul.f32 1.0, %v1675
    %v1677 = vtanh.pop %v1656
    %v1678 = vmul.f32 %v1676, %v1529
    %1680 = vrot.lane.b32.xlu0 %v1677, 32
    %v1681 = vpop.permute.xlu0 %1680
    %v1683 = vmul.f32 %v1676, %v1681
    %1685 = vrot.lane.b32.xlu0 %v1683, 32
    %v1686 = vpop.permute.xlu0 %1685
    %v1688 = vadd.f32 %v1678, %v1686
    %v1689 = vtanh.pop %v1688
    %1691 = vrot.lane.b32.xlu0 %v1689, 32
    %v1692 = vpop.permute.xlu0 %1691
    %v1694 = vmul.f32 %v1676, %v1692
    %1696 = vrot.lane.b32.xlu0 %v1694, 64
    %v1697 = vpop.permute.xlu0 %1696
    %v1698 = vsel %vm113, %v1697, 0
    %1700 = vmatpush.msra.mxu0 0.0
    %1701 = vmatpush.msra.mxu0 0.0
    %1702 = vmatpush.msra.mxu0 0.0
    %1703 = vmatpush.msra.mxu0 0.0
    %1704 = vmatpush.msra.mxu0 0.0
    %1705 = vmatpush.msra.mxu0 0.0
    %1706 = vmatpush.msra.mxu0 0.0
    %1707 = vmatpush.msra.mxu0 0.0
    %1708 = vmatpush.msra.mxu0 0.0
    %1709 = vmatpush.msra.mxu0 0.0
    %1710 = vmatpush.msra.mxu0 0.0
    %1711 = vmatpush.msra.mxu0 0.0
    %1712 = vmatpush.msra.mxu0 %v110
    %1713 = vmatpush.msra.mxu0 %v109
    %1714 = vmatpush.msra.mxu0 %v108
    %1715 = vmatpush.msra.mxu0 %v107
    %1716 = vmatmul.f32.gmra.mxu0 %v1698
    %v1717 = vpop.f32.mrf.mxu0
    %v1718 = vadd.f32 %v248, %v1717
    %1719 = vdwg.mxu0
    %s1720 = scalar_lea.vmem %s7, 18
    %1721 = vst.msk [vmem:[%s1720] sm:$0x3] %vm275, %v1718
    %1722 = vrot.lane.b32.xlu0 %v1626, 96
    %v1723 = vpop.permute.xlu0 %1722
    %v1725 = vsel %vm113, %v1718, %v1723
    %v1727 = vsel %vm118, %v1725, 0
    %1729 = vmatpush.msra.mxu0 0.0
    %1730 = vmatpush.msra.mxu0 0.0
    %1731 = vmatpush.msra.mxu0 0.0
    %1732 = vmatpush.msra.mxu0 0.0
    %1733 = vmatpush.msra.mxu0 0.0
    %1734 = vmatpush.msra.mxu0 0.0
    %1735 = vmatpush.msra.mxu0 0.0
    %1736 = vmatpush.msra.mxu0 0.0
    %1737 = vmatpush.msra.mxu0 %v96
    %1738 = vmatpush.msra.mxu0 %v95
    %1739 = vmatpush.msra.mxu0 %v94
    %1740 = vmatpush.msra.mxu0 %v93
    %1741 = vmatpush.msra.mxu0 %v92
    %1742 = vmatpush.msra.mxu0 %v91
    %1743 = vmatpush.msra.mxu0 %v90
    %1744 = vmatpush.msra.mxu0 %v89
    %1745 = vmatmul.f32.gmra.mxu0 %v1727
    %v1746 = vpop.f32.mrf.mxu0
    %v1747 = vadd.f32 %v116, %v1746
    %1748 = vdwg.mxu0
    %v1749 = vxor.u32 %v1747, 2147483648
    %v1750 = vmul.f32 %v1749, 1.442695
    %v1751 = vpow.pop %v1750
    %v1752 = vadd.f32 %v1751, 1.0
    %v1753 = vrcp.pop %v1752
    %v1754 = vmul.f32 %v1752, %v1753
    %v1755 = vsub.f32 1.0, %v1754
    %v1756 = vmul.f32 %v1753, %v1755
    %v1757 = vadd.f32 %v1753, %v1756
    %vm1758 = vweird.f32 %v1752
    %vm1759 = vweird.f32 %v1753
    %vm1760 = vmor %vm1758, %vm1759
    %v1761 = vsel %vm1760, %v1753, %v1757
    %v1762 = vand.u32 2147483647, %v1752
    %vm1763 = vcmp.eq.f32.partialorder %v1762, 8.507059e+37
    %v1764 = vand.u32 %v1752, 2147483648
    %v1765 = vor.u32 1.1754944e-38, %v1764
    %v1766 = vsel %vm1763, %v1765, %v1761
    %v1767 = vmul.f32 1.0, %v1766
    %v1768 = vtanh.pop %v1747
    %v1769 = vmul.f32 %v1767, %v1620
    %1771 = vrot.lane.b32.xlu0 %v1768, 32
    %v1772 = vpop.permute.xlu0 %1771
    %v1774 = vmul.f32 %v1767, %v1772
    %1776 = vrot.lane.b32.xlu0 %v1774, 32
    %v1777 = vpop.permute.xlu0 %1776
    %v1779 = vadd.f32 %v1769, %v1777
    %v1780 = vtanh.pop %v1779
    %1782 = vrot.lane.b32.xlu0 %v1780, 32
    %v1783 = vpop.permute.xlu0 %1782
    %v1785 = vmul.f32 %v1767, %v1783
    %1787 = vrot.lane.b32.xlu0 %v1785, 64
    %v1788 = vpop.permute.xlu0 %1787
    %1790 = vrot.lane.b32.xlu0 %v1694, 96
    %v1791 = vpop.permute.xlu0 %1790
    %v1793 = vsel %vm113, %v1788, %v1791
    %v1795 = vsel %vm118, %v1793, 0
    %1797 = vmatpush.msra.mxu0 0.0
    %1798 = vmatpush.msra.mxu0 0.0
    %1799 = vmatpush.msra.mxu0 0.0
    %1800 = vmatpush.msra.mxu0 0.0
    %1801 = vmatpush.msra.mxu0 0.0
    %1802 = vmatpush.msra.mxu0 0.0
    %1803 = vmatpush.msra.mxu0 0.0
    %1804 = vmatpush.msra.mxu0 0.0
    %1805 = vmatpush.msra.mxu0 %v105
    %1806 = vmatpush.msra.mxu0 %v104
    %1807 = vmatpush.msra.mxu0 %v103
    %1808 = vmatpush.msra.mxu0 %v102
    %1809 = vmatpush.msra.mxu0 %v101
    %1810 = vmatpush.msra.mxu0 %v100
    %1811 = vmatpush.msra.mxu0 %v99
    %1812 = vmatpush.msra.mxu0 %v98
    %1813 = vmatmul.f32.gmra.mxu0 %v1795
    %v1814 = vpop.f32.mrf.mxu0
    %v1815 = vadd.f32 %v185, %v1814
    %1816 = vdwg.mxu0
    %v1817 = vxor.u32 %v1815, 2147483648
    %v1818 = vmul.f32 %v1817, 1.442695
    %v1819 = vpow.pop %v1818
    %v1820 = vadd.f32 %v1819, 1.0
    %v1821 = vrcp.pop %v1820
    %v1822 = vmul.f32 %v1820, %v1821
    %v1823 = vsub.f32 1.0, %v1822
    %v1824 = vmul.f32 %v1821, %v1823
    %v1825 = vadd.f32 %v1821, %v1824
    %vm1826 = vweird.f32 %v1820
    %vm1827 = vweird.f32 %v1821
    %vm1828 = vmor %vm1826, %vm1827
    %v1829 = vsel %vm1828, %v1821, %v1825
    %v1830 = vand.u32 2147483647, %v1820
    %vm1831 = vcmp.eq.f32.partialorder %v1830, 8.507059e+37
    %v1832 = vand.u32 %v1820, 2147483648
    %v1833 = vor.u32 1.1754944e-38, %v1832
    %v1834 = vsel %vm1831, %v1833, %v1829
    %v1835 = vmul.f32 1.0, %v1834
    %v1836 = vtanh.pop %v1815
    %v1837 = vmul.f32 %v1835, %v1688
    %1839 = vrot.lane.b32.xlu0 %v1836, 32
    %v1840 = vpop.permute.xlu0 %1839
    %v1842 = vmul.f32 %v1835, %v1840
    %1844 = vrot.lane.b32.xlu0 %v1842, 32
    %v1845 = vpop.permute.xlu0 %1844
    %v1847 = vadd.f32 %v1837, %v1845
    %v1848 = vtanh.pop %v1847
    %1850 = vrot.lane.b32.xlu0 %v1848, 32
    %v1851 = vpop.permute.xlu0 %1850
    %v1853 = vmul.f32 %v1835, %v1851
    %1855 = vrot.lane.b32.xlu0 %v1853, 64
    %v1856 = vpop.permute.xlu0 %1855
    %v1857 = vsel %vm113, %v1856, 0
    %1859 = vmatpush.msra.mxu0 0.0
    %1860 = vmatpush.msra.mxu0 0.0
    %1861 = vmatpush.msra.mxu0 0.0
    %1862 = vmatpush.msra.mxu0 0.0
    %1863 = vmatpush.msra.mxu0 0.0
    %1864 = vmatpush.msra.mxu0 0.0
    %1865 = vmatpush.msra.mxu0 0.0
    %1866 = vmatpush.msra.mxu0 0.0
    %1867 = vmatpush.msra.mxu0 0.0
    %1868 = vmatpush.msra.mxu0 0.0
    %1869 = vmatpush.msra.mxu0 0.0
    %1870 = vmatpush.msra.mxu0 0.0
    %1871 = vmatpush.msra.mxu0 %v110
    %1872 = vmatpush.msra.mxu0 %v109
    %1873 = vmatpush.msra.mxu0 %v108
    %1874 = vmatpush.msra.mxu0 %v107
    %1875 = vmatmul.f32.gmra.mxu0 %v1857
    %v1876 = vpop.f32.mrf.mxu0
    %v1877 = vadd.f32 %v248, %v1876
    %1878 = vdwg.mxu0
    %s1879 = scalar_lea.vmem %s7, 20
    %1880 = vst.msk [vmem:[%s1879] sm:$0x3] %vm275, %v1877
    // Predicated region
    $region46: #{tpu_custom_call.1} parent=1 // pred_check
      _
    $region47: #{tpu_custom_call.1} parent=1 // pred_check_branch
      %1882 = sbr.rel (0) target = $region49
    $region48: #{tpu_custom_call.1} parent=1 // pred_region
      _
    $region49: #{tpu_custom_call.1} parent=1 // pred_fallthru
      _
    // Predicated region
    $region50: #{tpu_custom_call.1} parent=1 // pred_check
      _
    $region51: #{tpu_custom_call.1} parent=1 // pred_check_branch
      %1884 = sbr.rel (0) target = $region53
    $region52: #{tpu_custom_call.1} parent=1 // pred_region
      _
    $region53: #{tpu_custom_call.1} parent=1 // pred_fallthru
      _
    %1885 = vsyncpa [#allocation3], 1
    %1886 = vsyncpa [#allocation5], 1
    %1887 = vsyncpa [#allocation8], 1

</llo_original>
